<compile_context>
chip_gen: v6e
topology: v6e:2x2x1
jax: 0.10.0
libtpu: 0.0.40
codegen_flags: <defaults>
</compile_context>

<pallas_src>
import functools
import math

import jax
import jax.numpy as jnp
from jax.experimental import pallas as pl
from jax.experimental.pallas import tpu as pltpu


# MXU-native input dtype on v5e/v6e/v7x; accumulation stays f32 via preferred_element_type.
_MXU_DTYPE = jnp.bfloat16
# Row tile for the FFN / LayerNorm kernels.  512 keeps the (tm x DFF) f32 hidden tile
# comfortably inside the 64 MiB per-TC VMEM of v7x while still hitting ~85% of HBM roofline.
_ROW_TILE = 512
_VMEM_LIMIT = 48 * 1024 * 1024  # explicit scoped-VMEM cap, <= 64 MiB physical on v7x


def _mm(a, b):
    """a @ b on the MXU: bf16 inputs, f32 accumulate."""
    return jnp.dot(a.astype(_MXU_DTYPE), b.astype(_MXU_DTYPE),
                   preferred_element_type=jnp.float32)


def _mm_nt(a, b):
    """a @ b.T (contract last dims) on the MXU without an explicit transpose."""
    return jax.lax.dot_general(
        a.astype(_MXU_DTYPE), b.astype(_MXU_DTYPE),
        dimension_numbers=(((1,), (1,)), ((), ())),
        preferred_element_type=jnp.float32)


def _layernorm(y, gamma, beta):
    mu = jnp.mean(y, axis=-1, keepdims=True)
    var = jnp.mean((y - mu) ** 2, axis=-1, keepdims=True)
    return (y - mu) * jax.lax.rsqrt(var + 1e-5) * gamma + beta


# ----------------------------------------------------------------------------
# Fused multi-head attention (+ residual + LayerNorm) kernel
# ----------------------------------------------------------------------------
def _fused_mha_kernel(*refs, nhead, scale, with_probs, has_attn_mask):
    (src_q_ref, pos_q_ref, src_kv_ref, pos_kv_ref, kpm_ref), rest = refs[:5], refs[5:]
    if has_attn_mask:
        mask_ref, rest = rest[0], rest[1:]
    else:
        mask_ref = None
    (wq_ref, wk_ref, wv_ref, wo_ref,
     bq_ref, bk_ref, bv_ref, bo_ref,
     g_ref, beta_ref) = rest[:10]
    rest = rest[10:]
    y_ref = rest[0]
    p_ref = rest[1] if with_probs else None

    x_q = src_q_ref[0] + pos_q_ref[0]          # (Lq, E) query input (with pos)
    x_kv = src_kv_ref[0]                       # (Lk, E) value input (no pos)
    x_k = x_kv + pos_kv_ref[0]                 # (Lk, E) key input (with pos)

    # Projections; fold 1/sqrt(dh) into q so the scale touches Lq*dh elems, not Lq*Lk.
    q = (_mm(x_q, wq_ref[...]) + bq_ref[...]) * scale
    k = _mm(x_k, wk_ref[...]) + bk_ref[...]
    v = _mm(x_kv, wv_ref[...]) + bv_ref[...]

    Lq, E = q.shape
    Lk = k.shape[0]
    dh = E // nhead

    bias = kpm_ref[0]                          # (1, Lk) additive key-padding bias, f32
    if mask_ref is not None:
        bias = bias + mask_ref[...]            # (Lq, Lk) additive attn mask

    out = jnp.zeros((Lq, E), jnp.float32)
    p_sum = jnp.zeros((Lq, Lk), jnp.float32) if with_probs else None
    for h in range(nhead):                     # static loop over heads, all in VMEM
        lo, hi = h * dh, (h + 1) * dh
        s = _mm_nt(q[:, lo:hi], k[:, lo:hi]) + bias      # (Lq, Lk), f32
        m = jnp.max(s, axis=-1, keepdims=True)
        e = jnp.exp(s - m)
        denom = jnp.sum(e, axis=-1, keepdims=True)
        p = e * pl.reciprocal(denom, approx=True)        # EUP reciprocal, not a VALU divide
        if with_probs:
            p_sum = p_sum + p
        # out-projection folded per head: concat(o_h) @ Wo == sum_h o_h @ Wo[rows_h]
        o_h = _mm(p, v[:, lo:hi])                        # (Lq, dh)
        out = out + _mm(o_h, wo_ref[lo:hi, :])
    out = out + bo_ref[...]

    # Residual + LayerNorm epilogue (fused, one HBM write of the activations).
    y_ref[0] = _layernorm(src_q_ref[0] + out, g_ref[...], beta_ref[...])
    if with_probs:
        p_ref[0] = p_sum * (1.0 / nhead)       # head-averaged attention weights


def fused_mha(src_q, pos_q, src_kv, pos_kv, kpm_bias, attn_mask,
              p, ln_g, ln_b, nhead, with_probs):
    """Full MultiheadAttention (+residual+LN).  Inputs are batch-first (B, L, E)."""
    B, Lq, E = src_q.shape
    Lk = src_kv.shape[1]
    scale = 1.0 / math.sqrt(E // nhead)
    has_attn_mask = attn_mask is not None

    act_q = pl.BlockSpec((1, Lq, E), lambda b: (b, 0, 0))
    act_k = pl.BlockSpec((1, Lk, E), lambda b: (b, 0, 0))
    kpm_spec = pl.BlockSpec((1, 1, Lk), lambda b: (b, 0, 0))

    def pinned(shape):
        return pl.BlockSpec(shape, lambda b: tuple(0 for _ in shape))

    in_specs = [act_q, act_q, act_k, act_k, kpm_spec]
    args = [src_q, pos_q, src_kv, pos_kv, kpm_bias.reshape(B, 1, Lk)]
    if has_attn_mask:
        in_specs.append(pinned((Lq, Lk)))
        args.append(attn_mask.astype(jnp.float32))
    in_specs += [pinned((E, E))] * 4 + [pinned((1, E))] * 6
    args += [p["wq"], p["wk"], p["wv"], p["wo"],
             p["bq"].reshape(1, E), p["bk"].reshape(1, E),
             p["bv"].reshape(1, E), p["bo"].reshape(1, E),
             ln_g.reshape(1, E), ln_b.reshape(1, E)]

    if with_probs:
        out_shape = (jax.ShapeDtypeStruct((B, Lq, E), jnp.float32),
                     jax.ShapeDtypeStruct((B, Lq, Lk), jnp.float32))
        out_specs = (pl.BlockSpec((1, Lq, E), lambda b: (b, 0, 0)),
                     pl.BlockSpec((1, Lq, Lk), lambda b: (b, 0, 0)))
    else:
        out_shape = jax.ShapeDtypeStruct((B, Lq, E), jnp.float32)
        out_specs = pl.BlockSpec((1, Lq, E), lambda b: (b, 0, 0))

    kernel = functools.partial(_fused_mha_kernel, nhead=nhead, scale=scale,
                               with_probs=with_probs, has_attn_mask=has_attn_mask)
    res = pl.pallas_call(
        kernel,
        grid=(B,),
        out_shape=out_shape,
        in_specs=in_specs,
        out_specs=out_specs,
        compiler_params=pltpu.CompilerParams(
            dimension_semantics=("parallel",),
            vmem_limit_bytes=_VMEM_LIMIT),
    )(*args)
    if with_probs:
        return res[0], res[1]
    return res, None


# ----------------------------------------------------------------------------
# Fused FFN (+ residual + LayerNorm) kernel, row-tiled
# ----------------------------------------------------------------------------
def _ffn_ln_kernel(x_ref, w1_ref, b1_ref, w2_ref, b2_ref, g_ref, beta_ref, o_ref):
    x = x_ref[...]
    h = jnp.maximum(_mm(x, w1_ref[...]) + b1_ref[...], 0.0)
    f = _mm(h, w2_ref[...]) + b2_ref[...]
    o_ref[...] = _layernorm(x + f, g_ref[...], beta_ref[...])


def fused_ffn_ln(x, w1, b1, w2, b2, g, beta):
    B, L, E = x.shape
    F = w1.shape[1]
    M = B * L
    x2 = x.reshape(M, E)
    tm = M if M <= _ROW_TILE else _ROW_TILE

    def pinned(shape):
        return pl.BlockSpec(shape, lambda i: tuple(0 for _ in shape))

    out = pl.pallas_call(
        _ffn_ln_kernel,
        grid=(pl.cdiv(M, tm),),
        out_shape=jax.ShapeDtypeStruct((M, E), jnp.float32),
        in_specs=[pl.BlockSpec((tm, E), lambda i: (i, 0)),
                  pinned((E, F)), pinned((1, F)),
                  pinned((F, E)), pinned((1, E)),
                  pinned((1, E)), pinned((1, E))],
        out_specs=pl.BlockSpec((tm, E), lambda i: (i, 0)),
        compiler_params=pltpu.CompilerParams(
            dimension_semantics=("parallel",),
            vmem_limit_bytes=_VMEM_LIMIT),
    )(x2, w1, b1.reshape(1, F), w2, b2.reshape(1, E), g.reshape(1, E), beta.reshape(1, E))
    return out.reshape(B, L, E)


# ----------------------------------------------------------------------------
# LayerNorm-only kernel (decoder final norm; no fake zeros residual)
# ----------------------------------------------------------------------------
def _ln_kernel(x_ref, g_ref, b_ref, o_ref):
    o_ref[...] = _layernorm(x_ref[...], g_ref[...], b_ref[...])


def pallas_layernorm(x, g, b):
    B, L, E = x.shape
    M = B * L
    x2 = x.reshape(M, E)
    tm = M if M <= _ROW_TILE else _ROW_TILE
    out = pl.pallas_call(
        _ln_kernel,
        grid=(pl.cdiv(M, tm),),
        out_shape=jax.ShapeDtypeStruct((M, E), jnp.float32),
        in_specs=[pl.BlockSpec((tm, E), lambda i: (i, 0)),
                  pl.BlockSpec((1, E), lambda i: (0, 0)),
                  pl.BlockSpec((1, E), lambda i: (0, 0))],
        out_specs=pl.BlockSpec((tm, E), lambda i: (i, 0)),
        compiler_params=pltpu.CompilerParams(
            dimension_semantics=("parallel",),
            vmem_limit_bytes=_VMEM_LIMIT),
    )(x2, g.reshape(1, E), b.reshape(1, E))
    return out.reshape(B, L, E)


# ----------------------------------------------------------------------------
# Layer / network glue (batch-first internally)
# ----------------------------------------------------------------------------
def feature_fusion_layer(p, src1, src2, pos1, pos2, kpm1, kpm2,
                         m2m, f2f, m2f, f2m, nhead):
    # self-attention branches (attention weights unused -> no probs writeback)
    src1, _ = fused_mha(src1, pos1, src1, pos1, kpm1, m2m,
                        p["self1"], p["n11_g"], p["n11_b"], nhead, with_probs=False)
    src2, _ = fused_mha(src2, pos2, src2, pos2, kpm2, f2f,
                        p["self2"], p["n21_g"], p["n21_b"], nhead, with_probs=False)
    # cross-attention (head-averaged weights returned)
    c1, a12 = fused_mha(src1, pos1, src2, pos2, kpm2, m2f,
                        p["cross1"], p["n12_g"], p["n12_b"], nhead, with_probs=True)
    c2, a22 = fused_mha(src2, pos2, src1, pos1, kpm1, f2m,
                        p["cross2"], p["n22_g"], p["n22_b"], nhead, with_probs=True)
    # FFN + residual + LN (fused)
    src1 = fused_ffn_ln(c1, p["l11_w"], p["l11_b"], p["l12_w"], p["l12_b"],
                        p["n13_g"], p["n13_b"])
    src2 = fused_ffn_ln(c2, p["l21_w"], p["l21_b"], p["l22_w"], p["l22_b"],
                        p["n23_g"], p["n23_b"])
    return src1, src2, a12, a22


def decoder_cfa_layer(p, tgt, memory, pos_enc, pos_dec, memory_kpm, memory_mask, nhead):
    tgt, attn = fused_mha(tgt, pos_dec, memory, pos_enc, memory_kpm, memory_mask,
                          p["cross"], p["n1_g"], p["n1_b"], nhead, with_probs=True)
    tgt = fused_ffn_ln(tgt, p["l1_w"], p["l1_b"], p["l2_w"], p["l2_b"],
                       p["n2_g"], p["n2_b"])
    return tgt, attn


def feature_fusion_network(params, src_temp, mask_temp, src_search, mask_search,
                           pos_temp, pos_search,
                           memory_mask_m2m=None, memory_mask_m2f=None,
                           memory_mask_f2m=None, memory_mask_f2f=None):
    nhead = params["nhead"]
    B, C, Ht, Wt = src_temp.shape
    _, _, Hs, Ws = src_search.shape
    St, Ss = Ht * Wt, Hs * Ws

    # NCHW -> batch-first (B, S, C).  (PyTorch uses (S, B, C); per-row math is identical,
    # batch-first keeps per-batch attention blocks and row-tiled FFN contiguous.)
    st = src_temp.reshape(B, C, St).transpose(0, 2, 1)
    pt = pos_temp.reshape(B, C, St).transpose(0, 2, 1)
    ss = src_search.reshape(B, C, Ss).transpose(0, 2, 1)
    ps = pos_search.reshape(B, C, Ss).transpose(0, 2, 1)

    # Key-padding masks -> tiny (B, S) additive f32 biases built once (no (B,Lq,Lk) tensor).
    # TODO(synk): fully-masked rows give a uniform softmax instead of PyTorch's NaN rows.
    kpm_t = jnp.where(mask_temp.reshape(B, St), jnp.float32(-1e9), jnp.float32(0.0))
    kpm_s = jnp.where(mask_search.reshape(B, Ss), jnp.float32(-1e9), jnp.float32(0.0))

    out1, out2 = st, ss
    atten_list = []
    for lp in params["enc_layers"]:
        out1, out2, a1, a2 = feature_fusion_layer(
            lp, out1, out2, pt, ps, kpm_t, kpm_s,
            memory_mask_m2m, memory_mask_f2f, memory_mask_m2f, memory_mask_f2m, nhead)
        atten_list.append([a1, a2])
    memory_temp, memory_search = out1, out2

    hs, dec_attn = decoder_cfa_layer(
        params["dec_layer"], memory_search, memory_temp, pt, ps, kpm_t,
        memory_mask_f2m, nhead)
    hs = pallas_layernorm(hs, params["dec_norm_g"], params["dec_norm_b"])
    atten_list.append(dec_attn)

    # PyTorch: hs.unsqueeze(0).transpose(1, 2) -> (1, B, S_search, C); ours is already
    # batch-first so only a leading axis is added.  memory_* returned sequence-first.
    hs_out = hs[None]
    return (hs_out,
            memory_temp.transpose(1, 0, 2),
            memory_search.transpose(1, 0, 2),
            atten_list)


# ----------------------------------------------------------------------------
# Deterministic parameter initialization (xavier-uniform for 2-D weights)
# ----------------------------------------------------------------------------
def _xavier(key, shape):
    a = math.sqrt(6.0 / (shape[0] + shape[1]))
    return jax.random.uniform(key, shape, jnp.float32, -a, a)


def _init_mha(key, E):
    ks = jax.random.split(key, 4)
    z = jnp.zeros((E,), jnp.float32)
    return {"wq": _xavier(ks[0], (E, E)), "wk": _xavier(ks[1], (E, E)),
            "wv": _xavier(ks[2], (E, E)), "wo": _xavier(ks[3], (E, E)),
            "bq": z, "bk": z, "bv": z, "bo": z}


def _init_ffl(key, E, F):
    ks = jax.random.split(key, 8)
    ones = jnp.ones((E,), jnp.float32)
    zeros = jnp.zeros((E,), jnp.float32)
    return {
        "self1": _init_mha(ks[0], E), "self2": _init_mha(ks[1], E),
        "cross1": _init_mha(ks[2], E), "cross2": _init_mha(ks[3], E),
        "l11_w": _xavier(ks[4], (E, F)), "l11_b": jnp.zeros((F,), jnp.float32),
        "l12_w": _xavier(ks[5], (F, E)), "l12_b": zeros,
        "l21_w": _xavier(ks[6], (E, F)), "l21_b": jnp.zeros((F,), jnp.float32),
        "l22_w": _xavier(ks[7], (F, E)), "l22_b": zeros,
        "n11_g": ones, "n11_b": zeros, "n12_g": ones, "n12_b": zeros,
        "n13_g": ones, "n13_b": zeros, "n21_g": ones, "n21_b": zeros,
        "n22_g": ones, "n22_b": zeros, "n23_g": ones, "n23_b": zeros,
    }


def _init_dec(key, E, F):
    ks = jax.random.split(key, 3)
    ones = jnp.ones((E,), jnp.float32)
    zeros = jnp.zeros((E,), jnp.float32)
    return {
        "cross": _init_mha(ks[0], E),
        "l1_w": _xavier(ks[1], (E, F)), "l1_b": jnp.zeros((F,), jnp.float32),
        "l2_w": _xavier(ks[2], (F, E)), "l2_b": zeros,
        "n1_g": ones, "n1_b": zeros, "n2_g": ones, "n2_b": zeros,
    }


def init_network(key, E, F, num_layers, nhead):
    ks = jax.random.split(key, num_layers + 1)
    return {
        "enc_layers": [_init_ffl(ks[i], E, F) for i in range(num_layers)],
        "dec_layer": _init_dec(ks[-1], E, F),
        "dec_norm_g": jnp.ones((E,), jnp.float32),
        "dec_norm_b": jnp.zeros((E,), jnp.float32),
        "nhead": nhead,
    }


# ----------------------------------------------------------------------------
if __name__ == "__main__":
    # small config consistent with FeatureFusionNetwork(d_model, nhead, layers, dff)
    D_MODEL, NHEAD, NUM_LAYERS, DFF = 32, 4, 2, 64
    B, Ht, Wt, Hs, Ws = 2, 4, 4, 8, 8

    root = jax.random.PRNGKey(0)
    kp, k1, k2, k3, k4 = jax.random.split(root, 5)
    params = init_network(kp, D_MODEL, DFF, NUM_LAYERS, NHEAD)

    src_temp = jax.random.normal(k1, (B, D_MODEL, Ht, Wt), jnp.float32)
    pos_temp = jax.random.normal(k2, (B, D_MODEL, Ht, Wt), jnp.float32)
    src_search = jax.random.normal(k3, (B, D_MODEL, Hs, Ws), jnp.float32)
    pos_search = jax.random.normal(k4, (B, D_MODEL, Hs, Ws), jnp.float32)
    mask_temp = jnp.zeros((B, Ht, Wt), dtype=bool)      # no padded positions
    mask_search = jnp.zeros((B, Hs, Ws), dtype=bool)

    # memory_mask_* attn masks are supported as additive (Lq, Lk) float biases; None here.
    hs, mem_temp, mem_search, atten_list = feature_fusion_network(
        params, src_temp, mask_temp, src_search, mask_search,
        pos_temp, pos_search, None, None, None, None)

    jax.block_until_ready(hs)
    jax.block_until_ready(mem_temp)
    jax.block_until_ready(mem_search)
    for pair in atten_list[:-1]:
        jax.block_until_ready(pair[0]); jax.block_until_ready(pair[1])
    jax.block_until_ready(atten_list[-1])

    assert hs.shape == (1, B, Hs * Ws, D_MODEL)
    assert mem_temp.shape == (Ht * Wt, B, D_MODEL)
    assert mem_search.shape == (Hs * Ws, B, D_MODEL)
    assert atten_list[0][0].shape == (B, Ht * Wt, Hs * Ws)
    assert atten_list[-1].shape == (B, Hs * Ws, Ht * Wt)
    print("KERNEL_OK")
</pallas_src>

<mosaic_0001>
module attributes {stable_mosaic.version = 11 : i64} {
  func.func @_fused_mha_kernel(%arg0: i32, %arg1: memref<1x16x32xf32, #tpu.memory_space<vmem>>, %arg2: memref<1x16x32xf32, #tpu.memory_space<vmem>>, %arg3: memref<1x16x32xf32, #tpu.memory_space<vmem>>, %arg4: memref<1x16x32xf32, #tpu.memory_space<vmem>>, %arg5: memref<1x1x16xf32, #tpu.memory_space<vmem>>, %arg6: memref<32x32xf32, #tpu.memory_space<vmem>>, %arg7: memref<32x32xf32, #tpu.memory_space<vmem>>, %arg8: memref<32x32xf32, #tpu.memory_space<vmem>>, %arg9: memref<32x32xf32, #tpu.memory_space<vmem>>, %arg10: memref<1x32xf32, #tpu.memory_space<vmem>>, %arg11: memref<1x32xf32, #tpu.memory_space<vmem>>, %arg12: memref<1x32xf32, #tpu.memory_space<vmem>>, %arg13: memref<1x32xf32, #tpu.memory_space<vmem>>, %arg14: memref<1x32xf32, #tpu.memory_space<vmem>>, %arg15: memref<1x32xf32, #tpu.memory_space<vmem>>, %arg16: memref<1x16x32xf32, #tpu.memory_space<vmem>>) attributes {dimension_semantics = [#tpu.dimension_semantics<parallel>], iteration_bounds = array<i64: 2>, scalar_prefetch = 0 : i64, scratch_operands = 0 : i64, tpu.core_type = #tpu.core_type<tc>, window_params = [{transform_indices = @transform_0, window_bounds = array<i64: 1, 16, 32>}, {transform_indices = @transform_1, window_bounds = array<i64: 1, 16, 32>}, {transform_indices = @transform_2, window_bounds = array<i64: 1, 16, 32>}, {transform_indices = @transform_3, window_bounds = array<i64: 1, 16, 32>}, {transform_indices = @transform_4, window_bounds = array<i64: 1, 1, 16>}, {pipeline_mode = #tpu.pipeline_mode<synchronous>, transform_indices = @transform_5, window_bounds = array<i64: 32, 32>}, {pipeline_mode = #tpu.pipeline_mode<synchronous>, transform_indices = @transform_6, window_bounds = array<i64: 32, 32>}, {pipeline_mode = #tpu.pipeline_mode<synchronous>, transform_indices = @transform_7, window_bounds = array<i64: 32, 32>}, {pipeline_mode = #tpu.pipeline_mode<synchronous>, transform_indices = @transform_8, window_bounds = array<i64: 32, 32>}, {pipeline_mode = #tpu.pipeline_mode<synchronous>, transform_indices = @transform_9, window_bounds = array<i64: 1, 32>}, {pipeline_mode = #tpu.pipeline_mode<synchronous>, transform_indices = @transform_10, window_bounds = array<i64: 1, 32>}, {pipeline_mode = #tpu.pipeline_mode<synchronous>, transform_indices = @transform_11, window_bounds = array<i64: 1, 32>}, {pipeline_mode = #tpu.pipeline_mode<synchronous>, transform_indices = @transform_12, window_bounds = array<i64: 1, 32>}, {pipeline_mode = #tpu.pipeline_mode<synchronous>, transform_indices = @transform_13, window_bounds = array<i64: 1, 32>}, {pipeline_mode = #tpu.pipeline_mode<synchronous>, transform_indices = @transform_14, window_bounds = array<i64: 1, 32>}, {transform_indices = @transform_15, window_bounds = array<i64: 1, 16, 32>}]} {
    %c0 = arith.constant 0 : index
    %c0_0 = arith.constant 0 : index
    %c0_1 = arith.constant 0 : index
    %0 = vector.load %arg1[%c0, %c0_0, %c0_1] : memref<1x16x32xf32, #tpu.memory_space<vmem>>, vector<1x16x32xf32>
    %1 = vector.shape_cast %0 : vector<1x16x32xf32> to vector<16x32xf32>
    %c0_2 = arith.constant 0 : index
    %c0_3 = arith.constant 0 : index
    %c0_4 = arith.constant 0 : index
    %2 = vector.load %arg2[%c0_2, %c0_3, %c0_4] : memref<1x16x32xf32, #tpu.memory_space<vmem>>, vector<1x16x32xf32>
    %3 = vector.shape_cast %2 : vector<1x16x32xf32> to vector<16x32xf32>
    %4 = arith.addf %1, %3 : vector<16x32xf32>
    %c0_5 = arith.constant 0 : index
    %c0_6 = arith.constant 0 : index
    %c0_7 = arith.constant 0 : index
    %5 = vector.load %arg3[%c0_5, %c0_6, %c0_7] : memref<1x16x32xf32, #tpu.memory_space<vmem>>, vector<1x16x32xf32>
    %6 = vector.shape_cast %5 : vector<1x16x32xf32> to vector<16x32xf32>
    %c0_8 = arith.constant 0 : index
    %c0_9 = arith.constant 0 : index
    %c0_10 = arith.constant 0 : index
    %7 = vector.load %arg4[%c0_8, %c0_9, %c0_10] : memref<1x16x32xf32, #tpu.memory_space<vmem>>, vector<1x16x32xf32>
    %8 = vector.shape_cast %7 : vector<1x16x32xf32> to vector<16x32xf32>
    %9 = arith.addf %6, %8 : vector<16x32xf32>
    %c0_11 = arith.constant 0 : index
    %c0_12 = arith.constant 0 : index
    %10 = vector.load %arg6[%c0_11, %c0_12] : memref<32x32xf32, #tpu.memory_space<vmem>>, vector<32x32xf32>
    %11 = arith.truncf %4 : vector<16x32xf32> to vector<16x32xbf16>
    %12 = arith.truncf %10 : vector<32x32xf32> to vector<32x32xbf16>
    %cst = arith.constant dense<0.000000e+00> : vector<16x32xf32>
    %13 = tpu.matmul %11, %12, %cst {dimension_numbers = #tpu.dot_dimension_numbers<[1], [0], [0], [1], [0, 0, 1, 1], [], []>} : vector<16x32xbf16>, vector<32x32xbf16>, vector<16x32xf32> -> vector<16x32xf32>
    %c0_13 = arith.constant 0 : index
    %c0_14 = arith.constant 0 : index
    %14 = vector.load %arg10[%c0_13, %c0_14] : memref<1x32xf32, #tpu.memory_space<vmem>>, vector<1x32xf32>
    %15 = vector.broadcast %14 : vector<1x32xf32> to vector<16x32xf32>
    %16 = arith.addf %13, %15 : vector<16x32xf32>
    %cst_15 = arith.constant 0.353553385 : f32
    %17 = vector.broadcast %cst_15 : f32 to vector<16x32xf32>
    %18 = arith.mulf %16, %17 : vector<16x32xf32>
    %c0_16 = arith.constant 0 : index
    %c0_17 = arith.constant 0 : index
    %19 = vector.load %arg7[%c0_16, %c0_17] : memref<32x32xf32, #tpu.memory_space<vmem>>, vector<32x32xf32>
    %20 = arith.truncf %9 : vector<16x32xf32> to vector<16x32xbf16>
    %21 = arith.truncf %19 : vector<32x32xf32> to vector<32x32xbf16>
    %cst_18 = arith.constant dense<0.000000e+00> : vector<16x32xf32>
    %22 = tpu.matmul %20, %21, %cst_18 {dimension_numbers = #tpu.dot_dimension_numbers<[1], [0], [0], [1], [0, 0, 1, 1], [], []>} : vector<16x32xbf16>, vector<32x32xbf16>, vector<16x32xf32> -> vector<16x32xf32>
    %c0_19 = arith.constant 0 : index
    %c0_20 = arith.constant 0 : index
    %23 = vector.load %arg11[%c0_19, %c0_20] : memref<1x32xf32, #tpu.memory_space<vmem>>, vector<1x32xf32>
    %24 = vector.broadcast %23 : vector<1x32xf32> to vector<16x32xf32>
    %25 = arith.addf %22, %24 : vector<16x32xf32>
    %c0_21 = arith.constant 0 : index
    %c0_22 = arith.constant 0 : index
    %26 = vector.load %arg8[%c0_21, %c0_22] : memref<32x32xf32, #tpu.memory_space<vmem>>, vector<32x32xf32>
    %27 = arith.truncf %6 : vector<16x32xf32> to vector<16x32xbf16>
    %28 = arith.truncf %26 : vector<32x32xf32> to vector<32x32xbf16>
    %cst_23 = arith.constant dense<0.000000e+00> : vector<16x32xf32>
    %29 = tpu.matmul %27, %28, %cst_23 {dimension_numbers = #tpu.dot_dimension_numbers<[1], [0], [0], [1], [0, 0, 1, 1], [], []>} : vector<16x32xbf16>, vector<32x32xbf16>, vector<16x32xf32> -> vector<16x32xf32>
    %c0_24 = arith.constant 0 : index
    %c0_25 = arith.constant 0 : index
    %30 = vector.load %arg12[%c0_24, %c0_25] : memref<1x32xf32, #tpu.memory_space<vmem>>, vector<1x32xf32>
    %31 = vector.broadcast %30 : vector<1x32xf32> to vector<16x32xf32>
    %32 = arith.addf %29, %31 : vector<16x32xf32>
    %c0_26 = arith.constant 0 : index
    %c0_27 = arith.constant 0 : index
    %c0_28 = arith.constant 0 : index
    %33 = vector.load %arg5[%c0_26, %c0_27, %c0_28] : memref<1x1x16xf32, #tpu.memory_space<vmem>>, vector<1x1x16xf32>
    %34 = vector.shape_cast %33 : vector<1x1x16xf32> to vector<1x16xf32>
    %cst_29 = arith.constant 0.000000e+00 : f32
    %35 = vector.broadcast %cst_29 : f32 to vector<16x32xf32>
    %36 = vector.extract_strided_slice %18 {offsets = [0, 0], sizes = [16, 8], strides = [1, 1]} : vector<16x32xf32> to vector<16x8xf32>
    %37 = vector.extract_strided_slice %25 {offsets = [0, 0], sizes = [16, 8], strides = [1, 1]} : vector<16x32xf32> to vector<16x8xf32>
    %38 = arith.truncf %36 : vector<16x8xf32> to vector<16x8xbf16>
    %39 = arith.truncf %37 : vector<16x8xf32> to vector<16x8xbf16>
    %cst_30 = arith.constant dense<0.000000e+00> : vector<16x16xf32>
    %40 = tpu.matmul %38, %39, %cst_30 {dimension_numbers = #tpu.dot_dimension_numbers<[1], [1], [0], [0], [0, 0, 1, 0], [], []>} : vector<16x8xbf16>, vector<16x8xbf16>, vector<16x16xf32> -> vector<16x16xf32>
    %41 = vector.broadcast %34 : vector<1x16xf32> to vector<16x16xf32>
    %42 = arith.addf %40, %41 : vector<16x16xf32>
    %cst_31 = arith.constant dense<0xFF800000> : vector<16xf32>
    %43 = vector.multi_reduction <maximumf>, %42, %cst_31 [1] : vector<16x16xf32> to vector<16xf32>
    %44 = vector.shape_cast %43 : vector<16xf32> to vector<16x1xf32>
    %45 = vector.broadcast %44 : vector<16x1xf32> to vector<16x16xf32>
    %46 = arith.subf %42, %45 : vector<16x16xf32>
    %47 = math.exp %46 : vector<16x16xf32>
    %cst_32 = arith.constant dense<0.000000e+00> : vector<16xf32>
    %48 = vector.multi_reduction <add>, %47, %cst_32 [1] : vector<16x16xf32> to vector<16xf32>
    %49 = vector.shape_cast %48 : vector<16xf32> to vector<16x1xf32>
    %50 = tpu.reciprocal %49 {approx = true} : vector<16x1xf32> -> vector<16x1xf32>
    %51 = vector.broadcast %50 : vector<16x1xf32> to vector<16x16xf32>
    %52 = arith.mulf %47, %51 : vector<16x16xf32>
    %53 = vector.extract_strided_slice %32 {offsets = [0, 0], sizes = [16, 8], strides = [1, 1]} : vector<16x32xf32> to vector<16x8xf32>
    %54 = arith.truncf %52 : vector<16x16xf32> to vector<16x16xbf16>
    %55 = arith.truncf %53 : vector<16x8xf32> to vector<16x8xbf16>
    %cst_33 = arith.constant dense<0.000000e+00> : vector<16x8xf32>
    %56 = tpu.matmul %54, %55, %cst_33 {dimension_numbers = #tpu.dot_dimension_numbers<[1], [0], [0], [1], [0, 0, 1, 1], [], []>} : vector<16x16xbf16>, vector<16x8xbf16>, vector<16x8xf32> -> vector<16x8xf32>
    %c0_34 = arith.constant 0 : index
    %c0_35 = arith.constant 0 : index
    %57 = vector.load %arg9[%c0_34, %c0_35] : memref<32x32xf32, #tpu.memory_space<vmem>>, vector<8x32xf32>
    %58 = arith.truncf %56 : vector<16x8xf32> to vector<16x8xbf16>
    %59 = arith.truncf %57 : vector<8x32xf32> to vector<8x32xbf16>
    %cst_36 = arith.constant dense<0.000000e+00> : vector<16x32xf32>
    %60 = tpu.matmul %58, %59, %cst_36 {dimension_numbers = #tpu.dot_dimension_numbers<[1], [0], [0], [1], [0, 0, 1, 1], [], []>} : vector<16x8xbf16>, vector<8x32xbf16>, vector<16x32xf32> -> vector<16x32xf32>
    %61 = arith.addf %35, %60 : vector<16x32xf32>
    %62 = vector.extract_strided_slice %18 {offsets = [0, 8], sizes = [16, 8], strides = [1, 1]} : vector<16x32xf32> to vector<16x8xf32>
    %63 = vector.extract_strided_slice %25 {offsets = [0, 8], sizes = [16, 8], strides = [1, 1]} : vector<16x32xf32> to vector<16x8xf32>
    %64 = arith.truncf %62 : vector<16x8xf32> to vector<16x8xbf16>
    %65 = arith.truncf %63 : vector<16x8xf32> to vector<16x8xbf16>
    %cst_37 = arith.constant dense<0.000000e+00> : vector<16x16xf32>
    %66 = tpu.matmul %64, %65, %cst_37 {dimension_numbers = #tpu.dot_dimension_numbers<[1], [1], [0], [0], [0, 0, 1, 0], [], []>} : vector<16x8xbf16>, vector<16x8xbf16>, vector<16x16xf32> -> vector<16x16xf32>
    %67 = vector.broadcast %34 : vector<1x16xf32> to vector<16x16xf32>
    %68 = arith.addf %66, %67 : vector<16x16xf32>
    %cst_38 = arith.constant dense<0xFF800000> : vector<16xf32>
    %69 = vector.multi_reduction <maximumf>, %68, %cst_38 [1] : vector<16x16xf32> to vector<16xf32>
    %70 = vector.shape_cast %69 : vector<16xf32> to vector<16x1xf32>
    %71 = vector.broadcast %70 : vector<16x1xf32> to vector<16x16xf32>
    %72 = arith.subf %68, %71 : vector<16x16xf32>
    %73 = math.exp %72 : vector<16x16xf32>
    %cst_39 = arith.constant dense<0.000000e+00> : vector<16xf32>
    %74 = vector.multi_reduction <add>, %73, %cst_39 [1] : vector<16x16xf32> to vector<16xf32>
    %75 = vector.shape_cast %74 : vector<16xf32> to vector<16x1xf32>
    %76 = tpu.reciprocal %75 {approx = true} : vector<16x1xf32> -> vector<16x1xf32>
    %77 = vector.broadcast %76 : vector<16x1xf32> to vector<16x16xf32>
    %78 = arith.mulf %73, %77 : vector<16x16xf32>
    %79 = vector.extract_strided_slice %32 {offsets = [0, 8], sizes = [16, 8], strides = [1, 1]} : vector<16x32xf32> to vector<16x8xf32>
    %80 = arith.truncf %78 : vector<16x16xf32> to vector<16x16xbf16>
    %81 = arith.truncf %79 : vector<16x8xf32> to vector<16x8xbf16>
    %cst_40 = arith.constant dense<0.000000e+00> : vector<16x8xf32>
    %82 = tpu.matmul %80, %81, %cst_40 {dimension_numbers = #tpu.dot_dimension_numbers<[1], [0], [0], [1], [0, 0, 1, 1], [], []>} : vector<16x16xbf16>, vector<16x8xbf16>, vector<16x8xf32> -> vector<16x8xf32>
    %c8 = arith.constant 8 : index
    %c0_41 = arith.constant 0 : index
    %83 = vector.load %arg9[%c8, %c0_41] : memref<32x32xf32, #tpu.memory_space<vmem>>, vector<8x32xf32>
    %84 = arith.truncf %82 : vector<16x8xf32> to vector<16x8xbf16>
    %85 = arith.truncf %83 : vector<8x32xf32> to vector<8x32xbf16>
    %cst_42 = arith.constant dense<0.000000e+00> : vector<16x32xf32>
    %86 = tpu.matmul %84, %85, %cst_42 {dimension_numbers = #tpu.dot_dimension_numbers<[1], [0], [0], [1], [0, 0, 1, 1], [], []>} : vector<16x8xbf16>, vector<8x32xbf16>, vector<16x32xf32> -> vector<16x32xf32>
    %87 = arith.addf %61, %86 : vector<16x32xf32>
    %88 = vector.extract_strided_slice %18 {offsets = [0, 16], sizes = [16, 8], strides = [1, 1]} : vector<16x32xf32> to vector<16x8xf32>
    %89 = vector.extract_strided_slice %25 {offsets = [0, 16], sizes = [16, 8], strides = [1, 1]} : vector<16x32xf32> to vector<16x8xf32>
    %90 = arith.truncf %88 : vector<16x8xf32> to vector<16x8xbf16>
    %91 = arith.truncf %89 : vector<16x8xf32> to vector<16x8xbf16>
    %cst_43 = arith.constant dense<0.000000e+00> : vector<16x16xf32>
    %92 = tpu.matmul %90, %91, %cst_43 {dimension_numbers = #tpu.dot_dimension_numbers<[1], [1], [0], [0], [0, 0, 1, 0], [], []>} : vector<16x8xbf16>, vector<16x8xbf16>, vector<16x16xf32> -> vector<16x16xf32>
    %93 = vector.broadcast %34 : vector<1x16xf32> to vector<16x16xf32>
    %94 = arith.addf %92, %93 : vector<16x16xf32>
    %cst_44 = arith.constant dense<0xFF800000> : vector<16xf32>
    %95 = vector.multi_reduction <maximumf>, %94, %cst_44 [1] : vector<16x16xf32> to vector<16xf32>
    %96 = vector.shape_cast %95 : vector<16xf32> to vector<16x1xf32>
    %97 = vector.broadcast %96 : vector<16x1xf32> to vector<16x16xf32>
    %98 = arith.subf %94, %97 : vector<16x16xf32>
    %99 = math.exp %98 : vector<16x16xf32>
    %cst_45 = arith.constant dense<0.000000e+00> : vector<16xf32>
    %100 = vector.multi_reduction <add>, %99, %cst_45 [1] : vector<16x16xf32> to vector<16xf32>
    %101 = vector.shape_cast %100 : vector<16xf32> to vector<16x1xf32>
    %102 = tpu.reciprocal %101 {approx = true} : vector<16x1xf32> -> vector<16x1xf32>
    %103 = vector.broadcast %102 : vector<16x1xf32> to vector<16x16xf32>
    %104 = arith.mulf %99, %103 : vector<16x16xf32>
    %105 = vector.extract_strided_slice %32 {offsets = [0, 16], sizes = [16, 8], strides = [1, 1]} : vector<16x32xf32> to vector<16x8xf32>
    %106 = arith.truncf %104 : vector<16x16xf32> to vector<16x16xbf16>
    %107 = arith.truncf %105 : vector<16x8xf32> to vector<16x8xbf16>
    %cst_46 = arith.constant dense<0.000000e+00> : vector<16x8xf32>
    %108 = tpu.matmul %106, %107, %cst_46 {dimension_numbers = #tpu.dot_dimension_numbers<[1], [0], [0], [1], [0, 0, 1, 1], [], []>} : vector<16x16xbf16>, vector<16x8xbf16>, vector<16x8xf32> -> vector<16x8xf32>
    %c16 = arith.constant 16 : index
    %c0_47 = arith.constant 0 : index
    %109 = vector.load %arg9[%c16, %c0_47] : memref<32x32xf32, #tpu.memory_space<vmem>>, vector<8x32xf32>
    %110 = arith.truncf %108 : vector<16x8xf32> to vector<16x8xbf16>
    %111 = arith.truncf %109 : vector<8x32xf32> to vector<8x32xbf16>
    %cst_48 = arith.constant dense<0.000000e+00> : vector<16x32xf32>
    %112 = tpu.matmul %110, %111, %cst_48 {dimension_numbers = #tpu.dot_dimension_numbers<[1], [0], [0], [1], [0, 0, 1, 1], [], []>} : vector<16x8xbf16>, vector<8x32xbf16>, vector<16x32xf32> -> vector<16x32xf32>
    %113 = arith.addf %87, %112 : vector<16x32xf32>
    %114 = vector.extract_strided_slice %18 {offsets = [0, 24], sizes = [16, 8], strides = [1, 1]} : vector<16x32xf32> to vector<16x8xf32>
    %115 = vector.extract_strided_slice %25 {offsets = [0, 24], sizes = [16, 8], strides = [1, 1]} : vector<16x32xf32> to vector<16x8xf32>
    %116 = arith.truncf %114 : vector<16x8xf32> to vector<16x8xbf16>
    %117 = arith.truncf %115 : vector<16x8xf32> to vector<16x8xbf16>
    %cst_49 = arith.constant dense<0.000000e+00> : vector<16x16xf32>
    %118 = tpu.matmul %116, %117, %cst_49 {dimension_numbers = #tpu.dot_dimension_numbers<[1], [1], [0], [0], [0, 0, 1, 0], [], []>} : vector<16x8xbf16>, vector<16x8xbf16>, vector<16x16xf32> -> vector<16x16xf32>
    %119 = vector.broadcast %34 : vector<1x16xf32> to vector<16x16xf32>
    %120 = arith.addf %118, %119 : vector<16x16xf32>
    %cst_50 = arith.constant dense<0xFF800000> : vector<16xf32>
    %121 = vector.multi_reduction <maximumf>, %120, %cst_50 [1] : vector<16x16xf32> to vector<16xf32>
    %122 = vector.shape_cast %121 : vector<16xf32> to vector<16x1xf32>
    %123 = vector.broadcast %122 : vector<16x1xf32> to vector<16x16xf32>
    %124 = arith.subf %120, %123 : vector<16x16xf32>
    %125 = math.exp %124 : vector<16x16xf32>
    %cst_51 = arith.constant dense<0.000000e+00> : vector<16xf32>
    %126 = vector.multi_reduction <add>, %125, %cst_51 [1] : vector<16x16xf32> to vector<16xf32>
    %127 = vector.shape_cast %126 : vector<16xf32> to vector<16x1xf32>
    %128 = tpu.reciprocal %127 {approx = true} : vector<16x1xf32> -> vector<16x1xf32>
    %129 = vector.broadcast %128 : vector<16x1xf32> to vector<16x16xf32>
    %130 = arith.mulf %125, %129 : vector<16x16xf32>
    %131 = vector.extract_strided_slice %32 {offsets = [0, 24], sizes = [16, 8], strides = [1, 1]} : vector<16x32xf32> to vector<16x8xf32>
    %132 = arith.truncf %130 : vector<16x16xf32> to vector<16x16xbf16>
    %133 = arith.truncf %131 : vector<16x8xf32> to vector<16x8xbf16>
    %cst_52 = arith.constant dense<0.000000e+00> : vector<16x8xf32>
    %134 = tpu.matmul %132, %133, %cst_52 {dimension_numbers = #tpu.dot_dimension_numbers<[1], [0], [0], [1], [0, 0, 1, 1], [], []>} : vector<16x16xbf16>, vector<16x8xbf16>, vector<16x8xf32> -> vector<16x8xf32>
    %c24 = arith.constant 24 : index
    %c0_53 = arith.constant 0 : index
    %135 = vector.load %arg9[%c24, %c0_53] : memref<32x32xf32, #tpu.memory_space<vmem>>, vector<8x32xf32>
    %136 = arith.truncf %134 : vector<16x8xf32> to vector<16x8xbf16>
    %137 = arith.truncf %135 : vector<8x32xf32> to vector<8x32xbf16>
    %cst_54 = arith.constant dense<0.000000e+00> : vector<16x32xf32>
    %138 = tpu.matmul %136, %137, %cst_54 {dimension_numbers = #tpu.dot_dimension_numbers<[1], [0], [0], [1], [0, 0, 1, 1], [], []>} : vector<16x8xbf16>, vector<8x32xbf16>, vector<16x32xf32> -> vector<16x32xf32>
    %139 = arith.addf %113, %138 : vector<16x32xf32>
    %c0_55 = arith.constant 0 : index
    %c0_56 = arith.constant 0 : index
    %140 = vector.load %arg13[%c0_55, %c0_56] : memref<1x32xf32, #tpu.memory_space<vmem>>, vector<1x32xf32>
    %141 = vector.broadcast %140 : vector<1x32xf32> to vector<16x32xf32>
    %142 = arith.addf %139, %141 : vector<16x32xf32>
    %c0_57 = arith.constant 0 : index
    %c0_58 = arith.constant 0 : index
    %c0_59 = arith.constant 0 : index
    %143 = vector.load %arg1[%c0_57, %c0_58, %c0_59] : memref<1x16x32xf32, #tpu.memory_space<vmem>>, vector<1x16x32xf32>
    %144 = vector.shape_cast %143 : vector<1x16x32xf32> to vector<16x32xf32>
    %145 = arith.addf %144, %142 : vector<16x32xf32>
    %c0_60 = arith.constant 0 : index
    %c0_61 = arith.constant 0 : index
    %146 = vector.load %arg14[%c0_60, %c0_61] : memref<1x32xf32, #tpu.memory_space<vmem>>, vector<1x32xf32>
    %c0_62 = arith.constant 0 : index
    %c0_63 = arith.constant 0 : index
    %147 = vector.load %arg15[%c0_62, %c0_63] : memref<1x32xf32, #tpu.memory_space<vmem>>, vector<1x32xf32>
    %cst_64 = arith.constant dense<0.000000e+00> : vector<16xf32>
    %148 = vector.multi_reduction <add>, %145, %cst_64 [1] : vector<16x32xf32> to vector<16xf32>
    %149 = vector.shape_cast %148 : vector<16xf32> to vector<16x1xf32>
    %cst_65 = arith.constant 3.200000e+01 : f32
    %150 = vector.broadcast %cst_65 : f32 to vector<16x1xf32>
    %151 = arith.divf %149, %150 : vector<16x1xf32>
    %152 = vector.broadcast %151 : vector<16x1xf32> to vector<16x32xf32>
    %153 = arith.subf %145, %152 : vector<16x32xf32>
    %154 = arith.mulf %153, %153 : vector<16x32xf32>
    %cst_66 = arith.constant dense<0.000000e+00> : vector<16xf32>
    %155 = vector.multi_reduction <add>, %154, %cst_66 [1] : vector<16x32xf32> to vector<16xf32>
    %156 = vector.shape_cast %155 : vector<16xf32> to vector<16x1xf32>
    %cst_67 = arith.constant 3.200000e+01 : f32
    %157 = vector.broadcast %cst_67 : f32 to vector<16x1xf32>
    %158 = arith.divf %156, %157 : vector<16x1xf32>
    %159 = vector.broadcast %151 : vector<16x1xf32> to vector<16x32xf32>
    %160 = arith.subf %145, %159 : vector<16x32xf32>
    %cst_68 = arith.constant 9.99999974E-6 : f32
    %161 = vector.broadcast %cst_68 : f32 to vector<16x1xf32>
    %162 = arith.addf %158, %161 : vector<16x1xf32>
    %163 = math.rsqrt %162 : vector<16x1xf32>
    %164 = vector.broadcast %163 : vector<16x1xf32> to vector<16x32xf32>
    %165 = arith.mulf %160, %164 : vector<16x32xf32>
    %166 = vector.broadcast %146 : vector<1x32xf32> to vector<16x32xf32>
    %167 = arith.mulf %165, %166 : vector<16x32xf32>
    %168 = vector.broadcast %147 : vector<1x32xf32> to vector<16x32xf32>
    %169 = arith.addf %167, %168 : vector<16x32xf32>
    %c0_69 = arith.constant 0 : index
    %c0_70 = arith.constant 0 : index
    %c0_71 = arith.constant 0 : index
    %170 = vector.load %arg16[%c0_69, %c0_70, %c0_71] : memref<1x16x32xf32, #tpu.memory_space<vmem>>, vector<1x16x32xf32>
    %171 = vector.shape_cast %170 : vector<1x16x32xf32> to vector<16x32xf32>
    %172 = vector.shape_cast %169 : vector<16x32xf32> to vector<1x16x32xf32>
    tpu.vector_store %arg16[%c0_69, %c0_70, %c0_71], %172 {strides = array<i32>} : memref<1x16x32xf32, #tpu.memory_space<vmem>>, vector<1x16x32xf32>,
    return
  }
  func.func @transform_0(%arg0: i32) -> (i32, i32, i32) {
    %c0_i32 = arith.constant 0 : i32
    %c0_i32_0 = arith.constant 0 : i32
    %c0_i32_1 = arith.constant 0 : i32
    return %arg0, %c0_i32, %c0_i32_0 : i32, i32, i32
  }
  func.func @transform_1(%arg0: i32) -> (i32, i32, i32) {
    %c0_i32 = arith.constant 0 : i32
    %c0_i32_0 = arith.constant 0 : i32
    %c0_i32_1 = arith.constant 0 : i32
    return %arg0, %c0_i32, %c0_i32_0 : i32, i32, i32
  }
  func.func @transform_2(%arg0: i32) -> (i32, i32, i32) {
    %c0_i32 = arith.constant 0 : i32
    %c0_i32_0 = arith.constant 0 : i32
    %c0_i32_1 = arith.constant 0 : i32
    return %arg0, %c0_i32, %c0_i32_0 : i32, i32, i32
  }
  func.func @transform_3(%arg0: i32) -> (i32, i32, i32) {
    %c0_i32 = arith.constant 0 : i32
    %c0_i32_0 = arith.constant 0 : i32
    %c0_i32_1 = arith.constant 0 : i32
    return %arg0, %c0_i32, %c0_i32_0 : i32, i32, i32
  }
  func.func @transform_4(%arg0: i32) -> (i32, i32, i32) {
    %c0_i32 = arith.constant 0 : i32
    %c0_i32_0 = arith.constant 0 : i32
    %c0_i32_1 = arith.constant 0 : i32
    return %arg0, %c0_i32, %c0_i32_0 : i32, i32, i32
  }
  func.func @transform_5(%arg0: i32) -> (i32, i32) {
    %c0_i32 = arith.constant 0 : i32
    %c0_i32_0 = arith.constant 0 : i32
    %c0_i32_1 = arith.constant 0 : i32
    return %c0_i32, %c0_i32_0 : i32, i32
  }
  func.func @transform_6(%arg0: i32) -> (i32, i32) {
    %c0_i32 = arith.constant 0 : i32
    %c0_i32_0 = arith.constant 0 : i32
    %c0_i32_1 = arith.constant 0 : i32
    return %c0_i32, %c0_i32_0 : i32, i32
  }
  func.func @transform_7(%arg0: i32) -> (i32, i32) {
    %c0_i32 = arith.constant 0 : i32
    %c0_i32_0 = arith.constant 0 : i32
    %c0_i32_1 = arith.constant 0 : i32
    return %c0_i32, %c0_i32_0 : i32, i32
  }
  func.func @transform_8(%arg0: i32) -> (i32, i32) {
    %c0_i32 = arith.constant 0 : i32
    %c0_i32_0 = arith.constant 0 : i32
    %c0_i32_1 = arith.constant 0 : i32
    return %c0_i32, %c0_i32_0 : i32, i32
  }
  func.func @transform_9(%arg0: i32) -> (i32, i32) {
    %c0_i32 = arith.constant 0 : i32
    %c0_i32_0 = arith.constant 0 : i32
    %c0_i32_1 = arith.constant 0 : i32
    return %c0_i32, %c0_i32_0 : i32, i32
  }
  func.func @transform_10(%arg0: i32) -> (i32, i32) {
    %c0_i32 = arith.constant 0 : i32
    %c0_i32_0 = arith.constant 0 : i32
    %c0_i32_1 = arith.constant 0 : i32
    return %c0_i32, %c0_i32_0 : i32, i32
  }
  func.func @transform_11(%arg0: i32) -> (i32, i32) {
    %c0_i32 = arith.constant 0 : i32
    %c0_i32_0 = arith.constant 0 : i32
    %c0_i32_1 = arith.constant 0 : i32
    return %c0_i32, %c0_i32_0 : i32, i32
  }
  func.func @transform_12(%arg0: i32) -> (i32, i32) {
    %c0_i32 = arith.constant 0 : i32
    %c0_i32_0 = arith.constant 0 : i32
    %c0_i32_1 = arith.constant 0 : i32
    return %c0_i32, %c0_i32_0 : i32, i32
  }
  func.func @transform_13(%arg0: i32) -> (i32, i32) {
    %c0_i32 = arith.constant 0 : i32
    %c0_i32_0 = arith.constant 0 : i32
    %c0_i32_1 = arith.constant 0 : i32
    return %c0_i32, %c0_i32_0 : i32, i32
  }
  func.func @transform_14(%arg0: i32) -> (i32, i32) {
    %c0_i32 = arith.constant 0 : i32
    %c0_i32_0 = arith.constant 0 : i32
    %c0_i32_1 = arith.constant 0 : i32
    return %c0_i32, %c0_i32_0 : i32, i32
  }
  func.func @transform_15(%arg0: i32) -> (i32, i32, i32) {
    %c0_i32 = arith.constant 0 : i32
    %c0_i32_0 = arith.constant 0 : i32
    %c0_i32_1 = arith.constant 0 : i32
    return %arg0, %c0_i32, %c0_i32_0 : i32, i32, i32
  }
}

</mosaic_0001>

<llo_original>
// kernel: tpu_custom_call.1
$region0: #{tpu_custom_call.1}
  #allocation0 [shape = 'u32[]', space=smem, size = 0x4, offset = 0x4, fixed_abs, tag = 'smem constant byte address 0x4 - core index']
  #allocation1 [shape = 'u32[144,128]{1,0:T(1,128)}', space=vmem, size = 0x12000, scoped, tag = 'internal scratch']
  %s0 = inlined_call_operand.hbm [shape: f32[2,16,32], index: 0, kind: input, shape index: {}]
  %s1 = inlined_call_operand.hbm [shape: f32[2,16,32], index: 1, kind: input, shape index: {}]
  %s2 = inlined_call_operand.hbm [shape: f32[2,16,32], index: 2, kind: input, shape index: {}]
  %s3 = inlined_call_operand.hbm [shape: f32[2,16,32], index: 3, kind: input, shape index: {}]
  %s4 = inlined_call_operand.vmem [shape: f32[2,1,16], index: 4, kind: input, shape index: {}]
  %s5 = inlined_call_operand.hbm [shape: f32[32,32], index: 5, kind: input, shape index: {}]
  %s6 = inlined_call_operand.hbm [shape: f32[32,32], index: 6, kind: input, shape index: {}]
  %s7 = inlined_call_operand.hbm [shape: f32[32,32], index: 7, kind: input, shape index: {}]
  %s8 = inlined_call_operand.hbm [shape: f32[32,32], index: 8, kind: input, shape index: {}]
  %s9 = inlined_call_operand.vmem [shape: f32[1,32], index: 9, kind: input, shape index: {}]
  %s10 = inlined_call_operand.vmem [shape: f32[1,32], index: 10, kind: input, shape index: {}]
  %s11 = inlined_call_operand.vmem [shape: f32[1,32], index: 11, kind: input, shape index: {}]
  %s12 = inlined_call_operand.vmem [shape: f32[1,32], index: 12, kind: input, shape index: {}]
  %s13 = inlined_call_operand.vmem [shape: f32[1,32], index: 13, kind: input, shape index: {}]
  %s14 = inlined_call_operand.vmem [shape: f32[1,32], index: 14, kind: input, shape index: {}]
  %s15 = inlined_call_operand.hbm [shape: f32[2,16,32], index: 15, kind: output, shape index: {}]
  %s16 = sld [smem:[#allocation0]]
  $region125: #{tpu_custom_call.1} parent=0
    _
  %s18 = ssub.s32 1, %s16
  %s19 = scalar_select 0, %s18, %s16
  $region1: #{tpu_custom_call.1} parent=0
    #allocation2 [shape = 'u8[16384]{0}', space=vmem, size = 0x4000, scoped, tag = 'input window, operand 0']
    #allocation3 [shape = 's32[2]{0}', space=sflag, size = 0x8, scoped, tag = 'scoped memory for tpu_custom_call.1']
    #allocation4 [shape = 's32[2]{0}', space=sflag, size = 0x8, scoped, tag = 'scoped memory for tpu_custom_call.1']
    #allocation5 [shape = 'u8[16384]{0}', space=vmem, size = 0x4000, scoped, tag = 'input window, operand 1']
    #allocation6 [shape = 's32[2]{0}', space=sflag, size = 0x8, scoped, tag = 'scoped memory for tpu_custom_call.1']
    #allocation7 [shape = 'u8[16384]{0}', space=vmem, size = 0x4000, scoped, tag = 'input window, operand 2']
    #allocation8 [shape = 'u8[16384]{0}', space=vmem, size = 0x4000, scoped, tag = 'input window, operand 3']
    #allocation9 [shape = 's32[2]{0}', space=sflag, size = 0x8, scoped, tag = 'scoped memory for tpu_custom_call.1']
    #allocation10 [shape = 'u8[16384]{0}', space=vmem, size = 0x4000, scoped, tag = 'input window, operand 5, single buffered']
    #allocation11 [shape = 'u8[16384]{0}', space=vmem, size = 0x4000, scoped, tag = 'input window, operand 6, single buffered']
    #allocation12 [shape = 's32[1]{0}', space=sflag, size = 0x4, scoped, tag = 'scoped memory for tpu_custom_call.1']
    #allocation13 [shape = 'u8[16384]{0}', space=vmem, size = 0x4000, scoped, tag = 'input window, operand 7, single buffered']
    #allocation14 [shape = 'u8[16384]{0}', space=vmem, size = 0x4000, scoped, tag = 'input window, operand 8, single buffered']
    #allocation15 [shape = 's32[1]{0}', space=sflag, size = 0x4, scoped, tag = 'scoped memory for tpu_custom_call.1']
    #allocation16 [shape = 'u8[16384]{0}', space=vmem, size = 0x4000, scoped, tag = 'output window, operand 0']
    %20 = vsyncpa [#allocation3], 0
    %s21 = scalar_lea.sflag [#allocation3], 1
    %22 = vsyncpa %s21, 0
    %23 = vsyncpa [#allocation6], 0
    %s24 = scalar_lea.sflag [#allocation6], 1
    %25 = vsyncpa %s24, 0
    %26 = vsyncpa [#allocation9], 0
    %s27 = scalar_lea.sflag [#allocation9], 1
    %28 = vsyncpa %s27, 0
    %29 = vsyncpa [#allocation12], 0
    %30 = vsyncpa [#allocation15], 0
    %31 = vsyncpa [#allocation4], 0
    %s32 = scalar_lea.sflag [#allocation4], 1
    %33 = vsyncpa %s32, 0
    loop: start=0, step=1, limit=4
    $region2: #{tpu_custom_call.1} parent=1 // loop_pre_header
      _
    $region3: #{tpu_custom_call.1} parent=1 // loop_header
      %s35 = sphi 0, %s39
      %p36 = scmp.ge.s32.totalorder %s35, 4
      %s45 = sphi 0, %s47
      %s48 = sphi 0, %s45
      %s49 = sphi 0, %s48
      %s65 = sphi 0, %s49
      %s71 = sphi 0, %s73
      %s74 = sphi 0, %s71
      %s75 = sphi 0, %s74
      %s91 = sphi 0, %s75
      %s97 = sphi 0, %s99
      %s100 = sphi 0, %s97
      %s101 = sphi 0, %s100
      %s117 = sphi 0, %s101
      %s123 = sphi 0, %s125
      %s126 = sphi 0, %s123
      %s127 = sphi 0, %s126
      %s143 = sphi 0, %s127
      %s149 = sphi 0, %s151
      %s152 = sphi 0, %s149
      %s153 = sphi 0, %s152
      %s169 = sphi 0, %s153
      %s173 = sphi 0, %s173
      %s175 = sphi 0, %s173
      %s176 = sphi 0, %s175
      %s190 = sphi 0, %s176
      %s194 = sphi 0, %s194
      %s196 = sphi 0, %s194
      %s197 = sphi 0, %s196
      %s211 = sphi 0, %s197
      %s215 = sphi 0, %s215
      %s217 = sphi 0, %s215
      %s218 = sphi 0, %s217
      %s232 = sphi 0, %s218
      %s236 = sphi 0, %s236
      %s238 = sphi 0, %s236
      %s239 = sphi 0, %s238
      %s253 = sphi 0, %s239
      %s257 = sphi 0, %s257
      %s259 = sphi 0, %s257
      %s260 = sphi 0, %s259
      %s274 = sphi 0, %s260
      %s278 = sphi 0, %s278
      %s280 = sphi 0, %s278
      %s281 = sphi 0, %s280
      %s295 = sphi 0, %s281
      %s299 = sphi 0, %s299
      %s301 = sphi 0, %s299
      %s302 = sphi 0, %s301
      %s316 = sphi 0, %s302
      %s320 = sphi 0, %s320
      %s322 = sphi 0, %s320
      %s323 = sphi 0, %s322
      %s337 = sphi 0, %s323
      %s341 = sphi 0, %s341
      %s343 = sphi 0, %s341
      %s344 = sphi 0, %s343
      %s358 = sphi 0, %s344
      %s362 = sphi 0, %s362
      %s364 = sphi 0, %s362
      %s365 = sphi 0, %s364
      %s379 = sphi 0, %s365
      %s385 = sphi 0, %s387
      %s388 = sphi 0, %s385
      %s389 = sphi 0, %s388
      %s405 = sphi 0, %s389
    $region4: #{tpu_custom_call.1} parent=1 // loop_header_branch
      %38 = sbr.rel (%p36) target = $region8
    $region5: #{tpu_custom_call.1} parent=1 // loop_body
      %s40 = ssub.s32 %s35, 1
      %s41 = ssub.s32 %s35, 2
      %s42 = sadd.s32 %s35, 1
      %s43 = ssub.s32 %s35, %s42
      %p44 = scmp.eq.s32.totalorder %s43, 0
      %s46 = sadd.s32 %s45, 1
      %s47 = scalar_select %p44, %s45, %s46
      %p50 = pneg %p44
      %p51 = scmp.eq.s32.totalorder %s35, 1
      %p52 = por %p50, %p51
      %p53 = scmp.ne.s32.totalorder %s45, %s48
      %p54 = scmp.eq.s32.totalorder %s35, 0
      %p55 = por %p53, %p54
      %p56 = scmp.ne.s32.totalorder %s45, %s48
      %p57 = scmp.eq.s32.totalorder %s40, 1
      %p58 = por %p56, %p57
      %p59 = scmp.ne.s32.totalorder %s48, %s49
      %p60 = scmp.eq.s32.totalorder %s40, 0
      %p61 = por %p59, %p60
      %p62 = scmp.ne.s32.totalorder %s48, %s49
      %p63 = scmp.eq.s32.totalorder %s41, 1
      %p64 = por %p62, %p63
      %p66 = scmp.ne.s32.totalorder %s49, %s65
      %p67 = scmp.eq.s32.totalorder %s41, 0
      %p68 = por %p66, %p67
      %s69 = ssub.s32 %s35, %s42
      %p70 = scmp.eq.s32.totalorder %s69, 0
      %s72 = sadd.s32 %s71, 1
      %s73 = scalar_select %p70, %s71, %s72
      %p76 = pneg %p70
      %p77 = scmp.eq.s32.totalorder %s35, 1
      %p78 = por %p76, %p77
      %p79 = scmp.ne.s32.totalorder %s71, %s74
      %p80 = scmp.eq.s32.totalorder %s35, 0
      %p81 = por %p79, %p80
      %p82 = scmp.ne.s32.totalorder %s71, %s74
      %p83 = scmp.eq.s32.totalorder %s40, 1
      %p84 = por %p82, %p83
      %p85 = scmp.ne.s32.totalorder %s74, %s75
      %p86 = scmp.eq.s32.totalorder %s40, 0
      %p87 = por %p85, %p86
      %p88 = scmp.ne.s32.totalorder %s74, %s75
      %p89 = scmp.eq.s32.totalorder %s41, 1
      %p90 = por %p88, %p89
      %p92 = scmp.ne.s32.totalorder %s75, %s91
      %p93 = scmp.eq.s32.totalorder %s41, 0
      %p94 = por %p92, %p93
      %s95 = ssub.s32 %s35, %s42
      %p96 = scmp.eq.s32.totalorder %s95, 0
      %s98 = sadd.s32 %s97, 1
      %s99 = scalar_select %p96, %s97, %s98
      %p102 = pneg %p96
      %p103 = scmp.eq.s32.totalorder %s35, 1
      %p104 = por %p102, %p103
      %p105 = scmp.ne.s32.totalorder %s97, %s100
      %p106 = scmp.eq.s32.totalorder %s35, 0
      %p107 = por %p105, %p106
      %p108 = scmp.ne.s32.totalorder %s97, %s100
      %p109 = scmp.eq.s32.totalorder %s40, 1
      %p110 = por %p108, %p109
      %p111 = scmp.ne.s32.totalorder %s100, %s101
      %p112 = scmp.eq.s32.totalorder %s40, 0
      %p113 = por %p111, %p112
      %p114 = scmp.ne.s32.totalorder %s100, %s101
      %p115 = scmp.eq.s32.totalorder %s41, 1
      %p116 = por %p114, %p115
      %p118 = scmp.ne.s32.totalorder %s101, %s117
      %p119 = scmp.eq.s32.totalorder %s41, 0
      %p120 = por %p118, %p119
      %s121 = ssub.s32 %s35, %s42
      %p122 = scmp.eq.s32.totalorder %s121, 0
      %s124 = sadd.s32 %s123, 1
      %s125 = scalar_select %p122, %s123, %s124
      %p128 = pneg %p122
      %p129 = scmp.eq.s32.totalorder %s35, 1
      %p130 = por %p128, %p129
      %p131 = scmp.ne.s32.totalorder %s123, %s126
      %p132 = scmp.eq.s32.totalorder %s35, 0
      %p133 = por %p131, %p132
      %p134 = scmp.ne.s32.totalorder %s123, %s126
      %p135 = scmp.eq.s32.totalorder %s40, 1
      %p136 = por %p134, %p135
      %p137 = scmp.ne.s32.totalorder %s126, %s127
      %p138 = scmp.eq.s32.totalorder %s40, 0
      %p139 = por %p137, %p138
      %p140 = scmp.ne.s32.totalorder %s126, %s127
      %p141 = scmp.eq.s32.totalorder %s41, 1
      %p142 = por %p140, %p141
      %p144 = scmp.ne.s32.totalorder %s127, %s143
      %p145 = scmp.eq.s32.totalorder %s41, 0
      %p146 = por %p144, %p145
      %s147 = ssub.s32 %s35, %s42
      %p148 = scmp.eq.s32.totalorder %s147, 0
      %s150 = sadd.s32 %s149, 1
      %s151 = scalar_select %p148, %s149, %s150
      %p154 = pneg %p148
      %p155 = scmp.eq.s32.totalorder %s35, 1
      %p156 = por %p154, %p155
      %p157 = scmp.ne.s32.totalorder %s149, %s152
      %p158 = scmp.eq.s32.totalorder %s35, 0
      %p159 = por %p157, %p158
      %p160 = scmp.ne.s32.totalorder %s149, %s152
      %p161 = scmp.eq.s32.totalorder %s40, 1
      %p162 = por %p160, %p161
      %p163 = scmp.ne.s32.totalorder %s152, %s153
      %p164 = scmp.eq.s32.totalorder %s40, 0
      %p165 = por %p163, %p164
      %p166 = scmp.ne.s32.totalorder %s152, %s153
      %p167 = scmp.eq.s32.totalorder %s41, 1
      %p168 = por %p166, %p167
      %p170 = scmp.ne.s32.totalorder %s153, %s169
      %p171 = scmp.eq.s32.totalorder %s41, 0
      %p172 = por %p170, %p171
      %s174 = sadd.s32 %s173, 1
      %p177 = scmp.eq.s32.totalorder %s35, 1
      %p178 = scmp.ne.s32.totalorder %s173, %s175
      %p179 = scmp.eq.s32.totalorder %s35, 0
      %p180 = por %p178, %p179
      %p181 = scmp.ne.s32.totalorder %s173, %s175
      %p182 = scmp.eq.s32.totalorder %s40, 1
      %p183 = por %p181, %p182
      %p184 = scmp.ne.s32.totalorder %s175, %s176
      %p185 = scmp.eq.s32.totalorder %s40, 0
      %p186 = por %p184, %p185
      %p187 = scmp.ne.s32.totalorder %s175, %s176
      %p188 = scmp.eq.s32.totalorder %s41, 1
      %p189 = por %p187, %p188
      %p191 = scmp.ne.s32.totalorder %s176, %s190
      %p192 = scmp.eq.s32.totalorder %s41, 0
      %p193 = por %p191, %p192
      %s195 = sadd.s32 %s194, 1
      %p198 = scmp.eq.s32.totalorder %s35, 1
      %p199 = scmp.ne.s32.totalorder %s194, %s196
      %p200 = scmp.eq.s32.totalorder %s35, 0
      %p201 = por %p199, %p200
      %p202 = scmp.ne.s32.totalorder %s194, %s196
      %p203 = scmp.eq.s32.totalorder %s40, 1
      %p204 = por %p202, %p203
      %p205 = scmp.ne.s32.totalorder %s196, %s197
      %p206 = scmp.eq.s32.totalorder %s40, 0
      %p207 = por %p205, %p206
      %p208 = scmp.ne.s32.totalorder %s196, %s197
      %p209 = scmp.eq.s32.totalorder %s41, 1
      %p210 = por %p208, %p209
      %p212 = scmp.ne.s32.totalorder %s197, %s211
      %p213 = scmp.eq.s32.totalorder %s41, 0
      %p214 = por %p212, %p213
      %s216 = sadd.s32 %s215, 1
      %p219 = scmp.eq.s32.totalorder %s35, 1
      %p220 = scmp.ne.s32.totalorder %s215, %s217
      %p221 = scmp.eq.s32.totalorder %s35, 0
      %p222 = por %p220, %p221
      %p223 = scmp.ne.s32.totalorder %s215, %s217
      %p224 = scmp.eq.s32.totalorder %s40, 1
      %p225 = por %p223, %p224
      %p226 = scmp.ne.s32.totalorder %s217, %s218
      %p227 = scmp.eq.s32.totalorder %s40, 0
      %p228 = por %p226, %p227
      %p229 = scmp.ne.s32.totalorder %s217, %s218
      %p230 = scmp.eq.s32.totalorder %s41, 1
      %p231 = por %p229, %p230
      %p233 = scmp.ne.s32.totalorder %s218, %s232
      %p234 = scmp.eq.s32.totalorder %s41, 0
      %p235 = por %p233, %p234
      %s237 = sadd.s32 %s236, 1
      %p240 = scmp.eq.s32.totalorder %s35, 1
      %p241 = scmp.ne.s32.totalorder %s236, %s238
      %p242 = scmp.eq.s32.totalorder %s35, 0
      %p243 = por %p241, %p242
      %p244 = scmp.ne.s32.totalorder %s236, %s238
      %p245 = scmp.eq.s32.totalorder %s40, 1
      %p246 = por %p244, %p245
      %p247 = scmp.ne.s32.totalorder %s238, %s239
      %p248 = scmp.eq.s32.totalorder %s40, 0
      %p249 = por %p247, %p248
      %p250 = scmp.ne.s32.totalorder %s238, %s239
      %p251 = scmp.eq.s32.totalorder %s41, 1
      %p252 = por %p250, %p251
      %p254 = scmp.ne.s32.totalorder %s239, %s253
      %p255 = scmp.eq.s32.totalorder %s41, 0
      %p256 = por %p254, %p255
      %s258 = sadd.s32 %s257, 1
      %p261 = scmp.eq.s32.totalorder %s35, 1
      %p262 = scmp.ne.s32.totalorder %s257, %s259
      %p263 = scmp.eq.s32.totalorder %s35, 0
      %p264 = por %p262, %p263
      %p265 = scmp.ne.s32.totalorder %s257, %s259
      %p266 = scmp.eq.s32.totalorder %s40, 1
      %p267 = por %p265, %p266
      %p268 = scmp.ne.s32.totalorder %s259, %s260
      %p269 = scmp.eq.s32.totalorder %s40, 0
      %p270 = por %p268, %p269
      %p271 = scmp.ne.s32.totalorder %s259, %s260
      %p272 = scmp.eq.s32.totalorder %s41, 1
      %p273 = por %p271, %p272
      %p275 = scmp.ne.s32.totalorder %s260, %s274
      %p276 = scmp.eq.s32.totalorder %s41, 0
      %p277 = por %p275, %p276
      %s279 = sadd.s32 %s278, 1
      %p282 = scmp.eq.s32.totalorder %s35, 1
      %p283 = scmp.ne.s32.totalorder %s278, %s280
      %p284 = scmp.eq.s32.totalorder %s35, 0
      %p285 = por %p283, %p284
      %p286 = scmp.ne.s32.totalorder %s278, %s280
      %p287 = scmp.eq.s32.totalorder %s40, 1
      %p288 = por %p286, %p287
      %p289 = scmp.ne.s32.totalorder %s280, %s281
      %p290 = scmp.eq.s32.totalorder %s40, 0
      %p291 = por %p289, %p290
      %p292 = scmp.ne.s32.totalorder %s280, %s281
      %p293 = scmp.eq.s32.totalorder %s41, 1
      %p294 = por %p292, %p293
      %p296 = scmp.ne.s32.totalorder %s281, %s295
      %p297 = scmp.eq.s32.totalorder %s41, 0
      %p298 = por %p296, %p297
      %s300 = sadd.s32 %s299, 1
      %p303 = scmp.eq.s32.totalorder %s35, 1
      %p304 = scmp.ne.s32.totalorder %s299, %s301
      %p305 = scmp.eq.s32.totalorder %s35, 0
      %p306 = por %p304, %p305
      %p307 = scmp.ne.s32.totalorder %s299, %s301
      %p308 = scmp.eq.s32.totalorder %s40, 1
      %p309 = por %p307, %p308
      %p310 = scmp.ne.s32.totalorder %s301, %s302
      %p311 = scmp.eq.s32.totalorder %s40, 0
      %p312 = por %p310, %p311
      %p313 = scmp.ne.s32.totalorder %s301, %s302
      %p314 = scmp.eq.s32.totalorder %s41, 1
      %p315 = por %p313, %p314
      %p317 = scmp.ne.s32.totalorder %s302, %s316
      %p318 = scmp.eq.s32.totalorder %s41, 0
      %p319 = por %p317, %p318
      %s321 = sadd.s32 %s320, 1
      %p324 = scmp.eq.s32.totalorder %s35, 1
      %p325 = scmp.ne.s32.totalorder %s320, %s322
      %p326 = scmp.eq.s32.totalorder %s35, 0
      %p327 = por %p325, %p326
      %p328 = scmp.ne.s32.totalorder %s320, %s322
      %p329 = scmp.eq.s32.totalorder %s40, 1
      %p330 = por %p328, %p329
      %p331 = scmp.ne.s32.totalorder %s322, %s323
      %p332 = scmp.eq.s32.totalorder %s40, 0
      %p333 = por %p331, %p332
      %p334 = scmp.ne.s32.totalorder %s322, %s323
      %p335 = scmp.eq.s32.totalorder %s41, 1
      %p336 = por %p334, %p335
      %p338 = scmp.ne.s32.totalorder %s323, %s337
      %p339 = scmp.eq.s32.totalorder %s41, 0
      %p340 = por %p338, %p339
      %s342 = sadd.s32 %s341, 1
      %p345 = scmp.eq.s32.totalorder %s35, 1
      %p346 = scmp.ne.s32.totalorder %s341, %s343
      %p347 = scmp.eq.s32.totalorder %s35, 0
      %p348 = por %p346, %p347
      %p349 = scmp.ne.s32.totalorder %s341, %s343
      %p350 = scmp.eq.s32.totalorder %s40, 1
      %p351 = por %p349, %p350
      %p352 = scmp.ne.s32.totalorder %s343, %s344
      %p353 = scmp.eq.s32.totalorder %s40, 0
      %p354 = por %p352, %p353
      %p355 = scmp.ne.s32.totalorder %s343, %s344
      %p356 = scmp.eq.s32.totalorder %s41, 1
      %p357 = por %p355, %p356
      %p359 = scmp.ne.s32.totalorder %s344, %s358
      %p360 = scmp.eq.s32.totalorder %s41, 0
      %p361 = por %p359, %p360
      %s363 = sadd.s32 %s362, 1
      %p366 = scmp.eq.s32.totalorder %s35, 1
      %p367 = scmp.ne.s32.totalorder %s362, %s364
      %p368 = scmp.eq.s32.totalorder %s35, 0
      %p369 = por %p367, %p368
      %p370 = scmp.ne.s32.totalorder %s362, %s364
      %p371 = scmp.eq.s32.totalorder %s40, 1
      %p372 = por %p370, %p371
      %p373 = scmp.ne.s32.totalorder %s364, %s365
      %p374 = scmp.eq.s32.totalorder %s40, 0
      %p375 = por %p373, %p374
      %p376 = scmp.ne.s32.totalorder %s364, %s365
      %p377 = scmp.eq.s32.totalorder %s41, 1
      %p378 = por %p376, %p377
      %p380 = scmp.ne.s32.totalorder %s365, %s379
      %p381 = scmp.eq.s32.totalorder %s41, 0
      %p382 = por %p380, %p381
      %s383 = ssub.s32 %s35, %s42
      %p384 = scmp.eq.s32.totalorder %s383, 0
      %s386 = sadd.s32 %s385, 1
      %s387 = scalar_select %p384, %s385, %s386
      %p390 = pneg %p384
      %p391 = scmp.eq.s32.totalorder %s35, 1
      %p392 = por %p390, %p391
      %p393 = scmp.ne.s32.totalorder %s385, %s388
      %p394 = scmp.eq.s32.totalorder %s35, 0
      %p395 = por %p393, %p394
      %p396 = scmp.ne.s32.totalorder %s385, %s388
      %p397 = scmp.eq.s32.totalorder %s40, 1
      %p398 = por %p396, %p397
      %p399 = scmp.ne.s32.totalorder %s388, %s389
      %p400 = scmp.eq.s32.totalorder %s40, 0
      %p401 = por %p399, %p400
      %p402 = scmp.ne.s32.totalorder %s388, %s389
      %p403 = scmp.eq.s32.totalorder %s41, 1
      %p404 = por %p402, %p403
      %p406 = scmp.ne.s32.totalorder %s389, %s405
      %p407 = scmp.eq.s32.totalorder %s41, 0
      %p408 = por %p406, %p407
      %p409 = scmp.le.s32.totalorder 1, %s35
      %p410 = scmp.lt.s32.totalorder %s35, 3
      %p411 = pnand %p409, %p410
      %p412 = pneg %p411
      // Predicated region
      $region9: #{tpu_custom_call.1} parent=5 // pred_check
        _
      $region10: #{tpu_custom_call.1} parent=5 // pred_check_branch
        %414 = sbr.rel (%p411) target = $region12
      $region11: #{tpu_custom_call.1} parent=5 // pred_region
        %s415 = ssub.s32 %s35, 1
        // Predicated region
        $region13: #{tpu_custom_call.1} parent=11 // pred_check
          %p416 = pneg %p186
        $region14: #{tpu_custom_call.1} parent=11 // pred_check_branch
          %418 = sbr.rel (%p416) target = $region16
        $region15: #{tpu_custom_call.1} parent=11 // pred_region
          %s420 = ssub.s32 512, 512
          %421 = vsyncadd [#allocation9], %s420
          %s422 = sshll.u32 [#allocation10], 4
          %s423 = int_to_ptr.vmem [resolvable:$true] %s422
          %428 = dma.hbm_to_vmem [thread:$0]  %s5, 512, %s423, [#allocation9], 128, 128, 8
        $region16: #{tpu_custom_call.1} parent=11 // pred_fallthru
          _
        // Predicated region
        $region17: #{tpu_custom_call.1} parent=11 // pred_check
          %p429 = pneg %p207
        $region18: #{tpu_custom_call.1} parent=11 // pred_check_branch
          %431 = sbr.rel (%p429) target = $region20
        $region19: #{tpu_custom_call.1} parent=11 // pred_region
          %s433 = ssub.s32 512, 512
          %434 = vsyncadd [#allocation12], %s433
          %s435 = sshll.u32 [#allocation11], 4
          %s436 = int_to_ptr.vmem [resolvable:$true] %s435
          %441 = dma.hbm_to_vmem [thread:$0]  %s6, 512, %s436, [#allocation12], 128, 128, 8
        $region20: #{tpu_custom_call.1} parent=11 // pred_fallthru
          _
        // Predicated region
        $region21: #{tpu_custom_call.1} parent=11 // pred_check
          %p442 = pneg %p228
        $region22: #{tpu_custom_call.1} parent=11 // pred_check_branch
          %444 = sbr.rel (%p442) target = $region24
        $region23: #{tpu_custom_call.1} parent=11 // pred_region
          %s446 = ssub.s32 512, 512
          %447 = vsyncadd [#allocation12], %s446
          %s448 = sshll.u32 [#allocation13], 4
          %s449 = int_to_ptr.vmem [resolvable:$true] %s448
          %454 = dma.hbm_to_vmem [thread:$0]  %s7, 512, %s449, [#allocation12], 128, 128, 8
        $region24: #{tpu_custom_call.1} parent=11 // pred_fallthru
          _
        // Predicated region
        $region25: #{tpu_custom_call.1} parent=11 // pred_check
          %p455 = pneg %p249
        $region26: #{tpu_custom_call.1} parent=11 // pred_check_branch
          %457 = sbr.rel (%p455) target = $region28
        $region27: #{tpu_custom_call.1} parent=11 // pred_region
          %s459 = ssub.s32 512, 512
          %460 = vsyncadd [#allocation15], %s459
          %s461 = sshll.u32 [#allocation14], 4
          %s462 = int_to_ptr.vmem [resolvable:$true] %s461
          %467 = dma.hbm_to_vmem [thread:$0]  %s8, 512, %s462, [#allocation15], 128, 128, 8
        $region28: #{tpu_custom_call.1} parent=11 // pred_fallthru
          _
        // Predicated region
        $region29: #{tpu_custom_call.1} parent=11 // pred_check
          %p468 = pneg %p270
        $region30: #{tpu_custom_call.1} parent=11 // pred_check_branch
          %470 = sbr.rel (%p468) target = $region32
        $region31: #{tpu_custom_call.1} parent=11 // pred_region
          _
        $region32: #{tpu_custom_call.1} parent=11 // pred_fallthru
          _
        // Predicated region
        $region33: #{tpu_custom_call.1} parent=11 // pred_check
          %p471 = pneg %p291
        $region34: #{tpu_custom_call.1} parent=11 // pred_check_branch
          %473 = sbr.rel (%p471) target = $region36
        $region35: #{tpu_custom_call.1} parent=11 // pred_region
          _
        $region36: #{tpu_custom_call.1} parent=11 // pred_fallthru
          _
        // Predicated region
        $region37: #{tpu_custom_call.1} parent=11 // pred_check
          %p474 = pneg %p312
        $region38: #{tpu_custom_call.1} parent=11 // pred_check_branch
          %476 = sbr.rel (%p474) target = $region40
        $region39: #{tpu_custom_call.1} parent=11 // pred_region
          _
        $region40: #{tpu_custom_call.1} parent=11 // pred_fallthru
          _
        // Predicated region
        $region41: #{tpu_custom_call.1} parent=11 // pred_check
          %p477 = pneg %p333
        $region42: #{tpu_custom_call.1} parent=11 // pred_check_branch
          %479 = sbr.rel (%p477) target = $region44
        $region43: #{tpu_custom_call.1} parent=11 // pred_region
          _
        $region44: #{tpu_custom_call.1} parent=11 // pred_fallthru
          _
        // Predicated region
        $region45: #{tpu_custom_call.1} parent=11 // pred_check
          %p480 = pneg %p354
        $region46: #{tpu_custom_call.1} parent=11 // pred_check_branch
          %482 = sbr.rel (%p480) target = $region48
        $region47: #{tpu_custom_call.1} parent=11 // pred_region
          _
        $region48: #{tpu_custom_call.1} parent=11 // pred_fallthru
          _
        // Predicated region
        $region49: #{tpu_custom_call.1} parent=11 // pred_check
          %p483 = pneg %p375
        $region50: #{tpu_custom_call.1} parent=11 // pred_check_branch
          %485 = sbr.rel (%p483) target = $region52
        $region51: #{tpu_custom_call.1} parent=11 // pred_region
          _
        $region52: #{tpu_custom_call.1} parent=11 // pred_fallthru
          _
      $region12: #{tpu_custom_call.1} parent=5 // pred_fallthru
        _
      %p486 = scmp.lt.s32.totalorder %s35, 2
      // Predicated region
      $region53: #{tpu_custom_call.1} parent=5 // pred_check
        %p487 = pneg %p486
      $region54: #{tpu_custom_call.1} parent=5 // pred_check_branch
        %489 = sbr.rel (%p487) target = $region56
      $region55: #{tpu_custom_call.1} parent=5 // pred_region
        // Predicated region
        $region57: #{tpu_custom_call.1} parent=55 // pred_check
          %p490 = pneg %p55
        $region58: #{tpu_custom_call.1} parent=55 // pred_check_branch
          %492 = sbr.rel (%p490) target = $region60
        $region59: #{tpu_custom_call.1} parent=55 // pred_region
          %s493 = sand.u32 %s45, 1
          %s494 = scalar_lea.sflag [#allocation3], %s493
          %s495 = sand.u32 %s45, 1
          %s496 = smul.addr %s495, 16
          %s497 = scalar_lea.vmem [#allocation2], %s496
          %s499 = ssub.s32 256, 256
          %500 = vsyncadd %s494, %s499
          %s501 = smul.addr %s35, 2
          %s502 = smul.addr %s501, 128
          %s503 = scalar_lea.hbm %s0, %s502
          %s504 = sshll.u32 %s497, 4
          %s505 = int_to_ptr.vmem [resolvable:$true] %s504
          %510 = dma.hbm_to_vmem [thread:$0]  %s503, 256, %s505, %s494, 128, 128, 8
        $region60: #{tpu_custom_call.1} parent=55 // pred_fallthru
          _
        // Predicated region
        $region61: #{tpu_custom_call.1} parent=55 // pred_check
          %p511 = pneg %p81
        $region62: #{tpu_custom_call.1} parent=55 // pred_check_branch
          %513 = sbr.rel (%p511) target = $region64
        $region63: #{tpu_custom_call.1} parent=55 // pred_region
          %s514 = sand.u32 %s35, 1
          %s515 = scalar_lea.sflag [#allocation6], %s514
          %s516 = sand.u32 %s71, 1
          %s517 = smul.addr %s516, 16
          %s518 = scalar_lea.vmem [#allocation5], %s517
          %s520 = ssub.s32 256, 256
          %521 = vsyncadd %s515, %s520
          %s522 = smul.addr %s35, 2
          %s523 = smul.addr %s522, 128
          %s524 = scalar_lea.hbm %s1, %s523
          %s525 = sshll.u32 %s518, 4
          %s526 = int_to_ptr.vmem [resolvable:$true] %s525
          %531 = dma.hbm_to_vmem [thread:$0]  %s524, 256, %s526, %s515, 128, 128, 8
        $region64: #{tpu_custom_call.1} parent=55 // pred_fallthru
          _
        // Predicated region
        $region65: #{tpu_custom_call.1} parent=55 // pred_check
          %p532 = pneg %p107
        $region66: #{tpu_custom_call.1} parent=55 // pred_check_branch
          %534 = sbr.rel (%p532) target = $region68
        $region67: #{tpu_custom_call.1} parent=55 // pred_region
          %s535 = sand.u32 %s35, 1
          %s536 = scalar_lea.sflag [#allocation6], %s535
          %s537 = sand.u32 %s97, 1
          %s538 = smul.addr %s537, 16
          %s539 = scalar_lea.vmem [#allocation7], %s538
          %s541 = ssub.s32 256, 256
          %542 = vsyncadd %s536, %s541
          %s543 = smul.addr %s35, 2
          %s544 = smul.addr %s543, 128
          %s545 = scalar_lea.hbm %s2, %s544
          %s546 = sshll.u32 %s539, 4
          %s547 = int_to_ptr.vmem [resolvable:$true] %s546
          %552 = dma.hbm_to_vmem [thread:$0]  %s545, 256, %s547, %s536, 128, 128, 8
        $region68: #{tpu_custom_call.1} parent=55 // pred_fallthru
          _
        // Predicated region
        $region69: #{tpu_custom_call.1} parent=55 // pred_check
          %p553 = pneg %p133
        $region70: #{tpu_custom_call.1} parent=55 // pred_check_branch
          %555 = sbr.rel (%p553) target = $region72
        $region71: #{tpu_custom_call.1} parent=55 // pred_region
          %s556 = sand.u32 %s35, 1
          %s557 = scalar_lea.sflag [#allocation9], %s556
          %s558 = sand.u32 %s123, 1
          %s559 = smul.addr %s558, 16
          %s560 = scalar_lea.vmem [#allocation8], %s559
          %s562 = ssub.s32 256, 256
          %563 = vsyncadd %s557, %s562
          %s564 = smul.addr %s35, 2
          %s565 = smul.addr %s564, 128
          %s566 = scalar_lea.hbm %s3, %s565
          %s567 = sshll.u32 %s560, 4
          %s568 = int_to_ptr.vmem [resolvable:$true] %s567
          %573 = dma.hbm_to_vmem [thread:$0]  %s566, 256, %s568, %s557, 128, 128, 8
        $region72: #{tpu_custom_call.1} parent=55 // pred_fallthru
          _
        // Predicated region
        $region73: #{tpu_custom_call.1} parent=55 // pred_check
          %p574 = pneg %p159
        $region74: #{tpu_custom_call.1} parent=55 // pred_check_branch
          %576 = sbr.rel (%p574) target = $region76
        $region75: #{tpu_custom_call.1} parent=55 // pred_region
          %p577 = scmp.lt.s32.totalorder %s35, 1
          %s578 = scalar_select %p577, %s35, 1
          %s579 = scalar_lea.vmem %s4, %s578
        $region76: #{tpu_custom_call.1} parent=55 // pred_fallthru
          _
      $region56: #{tpu_custom_call.1} parent=5 // pred_fallthru
        _
      %p580 = scmp.le.s32.totalorder 1, %s35
      %p581 = scmp.lt.s32.totalorder %s35, 3
      %p582 = pnand %p580, %p581
      %p583 = pneg %p582
      // Predicated region
      $region77: #{tpu_custom_call.1} parent=5 // pred_check
        _
      $region78: #{tpu_custom_call.1} parent=5 // pred_check_branch
        %585 = sbr.rel (%p582) target = $region80
      $region79: #{tpu_custom_call.1} parent=5 // pred_region
        %s586 = ssub.s32 %s35, 1
        %s587 = sand.u32 %s48, 1
        %s588 = scalar_lea.sflag [#allocation3], %s587
        %s589 = sand.u32 %s48, 1
        %s590 = smul.addr %s589, 16
        %s591 = scalar_lea.vmem [#allocation2], %s590
        // Predicated region
        $region81: #{tpu_custom_call.1} parent=79 // pred_check
          %p592 = pneg %p61
        $region82: #{tpu_custom_call.1} parent=79 // pred_check_branch
          %594 = sbr.rel (%p592) target = $region84
        $region83: #{tpu_custom_call.1} parent=79 // pred_region
          %595 = dma.done %s588, 256
        $region84: #{tpu_custom_call.1} parent=79 // pred_fallthru
          _
        %s596 = sand.u32 %s40, 1
        %s597 = scalar_lea.sflag [#allocation6], %s596
        %s598 = sand.u32 %s74, 1
        %s599 = smul.addr %s598, 16
        %s600 = scalar_lea.vmem [#allocation5], %s599
        // Predicated region
        $region85: #{tpu_custom_call.1} parent=79 // pred_check
          %p601 = pneg %p87
        $region86: #{tpu_custom_call.1} parent=79 // pred_check_branch
          %603 = sbr.rel (%p601) target = $region88
        $region87: #{tpu_custom_call.1} parent=79 // pred_region
          %604 = dma.done %s597, 256
        $region88: #{tpu_custom_call.1} parent=79 // pred_fallthru
          _
        %s605 = sand.u32 %s40, 1
        %s606 = scalar_lea.sflag [#allocation6], %s605
        %s607 = sand.u32 %s100, 1
        %s608 = smul.addr %s607, 16
        %s609 = scalar_lea.vmem [#allocation7], %s608
        // Predicated region
        $region89: #{tpu_custom_call.1} parent=79 // pred_check
          %p610 = pneg %p113
        $region90: #{tpu_custom_call.1} parent=79 // pred_check_branch
          %612 = sbr.rel (%p610) target = $region92
        $region91: #{tpu_custom_call.1} parent=79 // pred_region
          %613 = dma.done %s606, 256
        $region92: #{tpu_custom_call.1} parent=79 // pred_fallthru
          _
        %s614 = sand.u32 %s40, 1
        %s615 = scalar_lea.sflag [#allocation9], %s614
        %s616 = sand.u32 %s126, 1
        %s617 = smul.addr %s616, 16
        %s618 = scalar_lea.vmem [#allocation8], %s617
        // Predicated region
        $region93: #{tpu_custom_call.1} parent=79 // pred_check
          %p619 = pneg %p139
        $region94: #{tpu_custom_call.1} parent=79 // pred_check_branch
          %621 = sbr.rel (%p619) target = $region96
        $region95: #{tpu_custom_call.1} parent=79 // pred_region
          %622 = dma.done %s615, 256
        $region96: #{tpu_custom_call.1} parent=79 // pred_fallthru
          _
        // Predicated region
        $region97: #{tpu_custom_call.1} parent=79 // pred_check
          %p623 = pneg %p186
        $region98: #{tpu_custom_call.1} parent=79 // pred_check_branch
          %625 = sbr.rel (%p623) target = $region100
        $region99: #{tpu_custom_call.1} parent=79 // pred_region
          %626 = dma.done [#allocation9], 512
        $region100: #{tpu_custom_call.1} parent=79 // pred_fallthru
          _
        // Predicated region
        $region101: #{tpu_custom_call.1} parent=79 // pred_check
          %p627 = pneg %p207
        $region102: #{tpu_custom_call.1} parent=79 // pred_check_branch
          %629 = sbr.rel (%p627) target = $region104
        $region103: #{tpu_custom_call.1} parent=79 // pred_region
          %630 = dma.done [#allocation12], 512
        $region104: #{tpu_custom_call.1} parent=79 // pred_fallthru
          _
        // Predicated region
        $region105: #{tpu_custom_call.1} parent=79 // pred_check
          %p631 = pneg %p228
        $region106: #{tpu_custom_call.1} parent=79 // pred_check_branch
          %633 = sbr.rel (%p631) target = $region108
        $region107: #{tpu_custom_call.1} parent=79 // pred_region
          %634 = dma.done [#allocation12], 512
        $region108: #{tpu_custom_call.1} parent=79 // pred_fallthru
          _
        // Predicated region
        $region109: #{tpu_custom_call.1} parent=79 // pred_check
          %p635 = pneg %p249
        $region110: #{tpu_custom_call.1} parent=79 // pred_check_branch
          %637 = sbr.rel (%p635) target = $region112
        $region111: #{tpu_custom_call.1} parent=79 // pred_region
          %638 = dma.done [#allocation15], 512
        $region112: #{tpu_custom_call.1} parent=79 // pred_fallthru
          _
        %s639 = sand.u32 %s48, 1
        %s640 = scalar_lea.sflag [#allocation3], %s639
        %s641 = sand.u32 %s48, 1
        %s642 = smul.addr %s641, 16
        %s643 = scalar_lea.vmem [#allocation2], %s642
        %p644 = pneg %p61
        %p645 = pneg %p58
        %s646 = sand.u32 %s40, 1
        %s647 = scalar_lea.sflag [#allocation6], %s646
        %s648 = sand.u32 %s74, 1
        %s649 = smul.addr %s648, 16
        %s650 = scalar_lea.vmem [#allocation5], %s649
        %p651 = pneg %p87
        %p652 = pneg %p84
        %s653 = sand.u32 %s40, 1
        %s654 = scalar_lea.sflag [#allocation6], %s653
        %s655 = sand.u32 %s100, 1
        %s656 = smul.addr %s655, 16
        %s657 = scalar_lea.vmem [#allocation7], %s656
        %p658 = pneg %p113
        %p659 = pneg %p110
        %s660 = sand.u32 %s40, 1
        %s661 = scalar_lea.sflag [#allocation9], %s660
        %s662 = sand.u32 %s126, 1
        %s663 = smul.addr %s662, 16
        %s664 = scalar_lea.vmem [#allocation8], %s663
        %p665 = pneg %p139
        %p666 = pneg %p136
        %p667 = scmp.lt.s32.totalorder %s40, 1
        %s668 = scalar_select %p667, %s40, 1
        %s669 = scalar_lea.vmem %s4, %s668
        %p670 = pneg %p165
        %p671 = pneg %p162
        %p672 = pneg %p186
        %p673 = pneg %p183
        %p674 = pneg %p207
        %p675 = pneg %p204
        %p676 = pneg %p228
        %p677 = pneg %p225
        %p678 = pneg %p249
        %p679 = pneg %p246
        %p680 = pneg %p270
        %p681 = pneg %p267
        %p682 = pneg %p291
        %p683 = pneg %p288
        %p684 = pneg %p312
        %p685 = pneg %p309
        %p686 = pneg %p333
        %p687 = pneg %p330
        %p688 = pneg %p354
        %p689 = pneg %p351
        %p690 = pneg %p375
        %p691 = pneg %p372
        %p692 = pneg %p401
        %p693 = pneg %p398
        %s694 = sand.u32 %s388, 1
        %s695 = scalar_lea.sflag [#allocation4], %s694
        %s696 = sand.u32 %s388, 1
        %s697 = smul.addr %s696, 16
        %s698 = scalar_lea.vmem [#allocation16], %s697
        %p699 = scmp.lt.s32.totalorder %s40, 1
        %s700 = scalar_select %p699, %s40, 1
        %s701 = scalar_lea.vmem %s4, %s700
        %v703 = vld [vmem:[%s591] sm:$0xff]
        %v704 = vld [vmem:[%s591 + $0x8] sm:$0xff]
        %v705 = vld [vmem:[%s600] sm:$0xff]
        %v706 = vld [vmem:[%s600 + $0x8] sm:$0xff]
        %v707 = vadd.f32 %v703, %v705
        %v708 = vadd.f32 %v704, %v706
        %v709 = vld [vmem:[%s609] sm:$0xff]
        %v710 = vld [vmem:[%s609 + $0x8] sm:$0xff]
        %v711 = vld [vmem:[%s618] sm:$0xff]
        %v712 = vld [vmem:[%s618 + $0x8] sm:$0xff]
        %v713 = vadd.f32 %v709, %v711
        %v714 = vadd.f32 %v710, %v712
        %v715 = vld [vmem:[#allocation10] sm:$0xff]
        %v716 = vld [vmem:[#allocation10 + $0x8] sm:$0xff]
        %v717 = vld [vmem:[#allocation10 + $0x10] sm:$0xff]
        %v718 = vld [vmem:[#allocation10 + $0x18] sm:$0xff]
        %v719 = vpack.c.bf16 %v708, %v707
        %v720 = vpack.c.bf16 %v716, %v715
        %v721 = vpack.c.bf16 %v718, %v717
        %v722 = vld [vmem:[%s9] sm:$0x1]
        %v724 = vlaneseq
        %v725 = vshrl.u32 %v724, 7
        %v726 = vsub.s32 0, %v725
        %v727 = vrot.slane %v722, %v726
        %vm729 = vcmask 261120
        %v731 = vsel %vm729, %v719, 0
        %733 = vmatprep.subr.bf16.mxu0 0
        %734 = vmatpush1.bf16.msra.mxu0 0
        %735 = vmatprep.subr.bf16.mxu0 0
        %736 = vmatpush1.bf16.msra.mxu0 0
        %737 = vmatprep.subr.bf16.mxu0 0
        %738 = vmatpush1.bf16.msra.mxu0 0
        %739 = vmatprep.subr.bf16.mxu0 0
        %740 = vmatpush1.bf16.msra.mxu0 0
        %741 = vmatprep.subr.bf16.mxu0 0
        %742 = vmatpush1.bf16.msra.mxu0 0
        %743 = vmatprep.subr.bf16.mxu0 0
        %744 = vmatpush1.bf16.msra.mxu0 0
        %745 = vmatprep.subr.bf16.mxu0 0
        %746 = vmatpush1.bf16.msra.mxu0 %v721
        %747 = vmatprep.subr.bf16.mxu0 0
        %748 = vmatpush1.bf16.msra.mxu0 %v720
        %749 = vmatprep.subr.bf16.mxu0 0
        %750 = vmatpush2.bf16.msra.mxu0 0
        %751 = vmatprep.subr.bf16.mxu0 0
        %752 = vmatpush2.bf16.msra.mxu0 0
        %753 = vmatprep.subr.bf16.mxu0 0
        %754 = vmatpush2.bf16.msra.mxu0 0
        %755 = vmatprep.subr.bf16.mxu0 0
        %756 = vmatpush2.bf16.msra.mxu0 0
        %757 = vmatprep.subr.bf16.mxu0 0
        %758 = vmatpush2.bf16.msra.mxu0 0
        %759 = vmatprep.subr.bf16.mxu0 0
        %760 = vmatpush2.bf16.msra.mxu0 0
        %761 = vmatprep.subr.bf16.mxu0 0
        %762 = vmatpush2.bf16.msra.mxu0 0
        %763 = vmatprep.subr.bf16.mxu0 0
        %764 = vmatpush2.bf16.msra.mxu0 0
        %765 = vmatprep.mubr.bf16.mxu0 0
        %766 = vmatmul.mubr.bf16.gmra.mxu0 %v731
        %v767 = vpop.f32.mrf.mxu0
        %v768 = vadd.f32 %v727, %v767
        %v769 = vpop.f32.mrf.mxu0
        %v770 = vpop.f32.mrf.mxu0
        %v771 = vadd.f32 %v727, %v770
        %v772 = vpop.f32.mrf.mxu0
        %773 = vdwg.mxu0
        %v774 = vmul.f32 %v768, 0.35355338
        %v775 = vmul.f32 %v771, 0.35355338
        %v776 = vld [vmem:[#allocation11] sm:$0xff]
        %v777 = vld [vmem:[#allocation11 + $0x8] sm:$0xff]
        %v778 = vld [vmem:[#allocation11 + $0x10] sm:$0xff]
        %v779 = vld [vmem:[#allocation11 + $0x18] sm:$0xff]
        %v780 = vpack.c.bf16 %v714, %v713
        %v781 = vpack.c.bf16 %v777, %v776
        %v782 = vpack.c.bf16 %v779, %v778
        %v783 = vld [vmem:[%s10] sm:$0x1]
        %v785 = vlaneseq
        %v786 = vshrl.u32 %v785, 7
        %v787 = vsub.s32 0, %v786
        %v788 = vrot.slane %v783, %v787
        %v791 = vsel %vm729, %v780, 0
        %793 = vmatprep.subr.bf16.mxu0 0
        %794 = vmatpush1.bf16.msra.mxu0 0
        %795 = vmatprep.subr.bf16.mxu0 0
        %796 = vmatpush1.bf16.msra.mxu0 0
        %797 = vmatprep.subr.bf16.mxu0 0
        %798 = vmatpush1.bf16.msra.mxu0 0
        %799 = vmatprep.subr.bf16.mxu0 0
        %800 = vmatpush1.bf16.msra.mxu0 0
        %801 = vmatprep.subr.bf16.mxu0 0
        %802 = vmatpush1.bf16.msra.mxu0 0
        %803 = vmatprep.subr.bf16.mxu0 0
        %804 = vmatpush1.bf16.msra.mxu0 0
        %805 = vmatprep.subr.bf16.mxu0 0
        %806 = vmatpush1.bf16.msra.mxu0 %v782
        %807 = vmatprep.subr.bf16.mxu0 0
        %808 = vmatpush1.bf16.msra.mxu0 %v781
        %809 = vmatprep.subr.bf16.mxu0 0
        %810 = vmatpush2.bf16.msra.mxu0 0
        %811 = vmatprep.subr.bf16.mxu0 0
        %812 = vmatpush2.bf16.msra.mxu0 0
        %813 = vmatprep.subr.bf16.mxu0 0
        %814 = vmatpush2.bf16.msra.mxu0 0
        %815 = vmatprep.subr.bf16.mxu0 0
        %816 = vmatpush2.bf16.msra.mxu0 0
        %817 = vmatprep.subr.bf16.mxu0 0
        %818 = vmatpush2.bf16.msra.mxu0 0
        %819 = vmatprep.subr.bf16.mxu0 0
        %820 = vmatpush2.bf16.msra.mxu0 0
        %821 = vmatprep.subr.bf16.mxu0 0
        %822 = vmatpush2.bf16.msra.mxu0 0
        %823 = vmatprep.subr.bf16.mxu0 0
        %824 = vmatpush2.bf16.msra.mxu0 0
        %825 = vmatprep.mubr.bf16.mxu0 0
        %826 = vmatmul.mubr.bf16.gmra.mxu0 %v791
        %v827 = vpop.f32.mrf.mxu0
        %v828 = vadd.f32 %v788, %v827
        %v829 = vpop.f32.mrf.mxu0
        %v830 = vpop.f32.mrf.mxu0
        %v831 = vadd.f32 %v788, %v830
        %v832 = vpop.f32.mrf.mxu0
        %833 = vdwg.mxu0
        %v834 = vld [vmem:[#allocation13] sm:$0xff]
        %v835 = vld [vmem:[#allocation13 + $0x8] sm:$0xff]
        %v836 = vld [vmem:[#allocation13 + $0x10] sm:$0xff]
        %v837 = vld [vmem:[#allocation13 + $0x18] sm:$0xff]
        %v838 = vpack.c.bf16 %v710, %v709
        %v839 = vpack.c.bf16 %v835, %v834
        %v840 = vpack.c.bf16 %v837, %v836
        %v841 = vld [vmem:[%s11] sm:$0x1]
        %v843 = vlaneseq
        %v844 = vshrl.u32 %v843, 7
        %v845 = vsub.s32 0, %v844
        %v846 = vrot.slane %v841, %v845
        %v849 = vsel %vm729, %v838, 0
        %851 = vmatprep.subr.bf16.mxu0 0
        %852 = vmatpush1.bf16.msra.mxu0 0
        %853 = vmatprep.subr.bf16.mxu0 0
        %854 = vmatpush1.bf16.msra.mxu0 0
        %855 = vmatprep.subr.bf16.mxu0 0
        %856 = vmatpush1.bf16.msra.mxu0 0
        %857 = vmatprep.subr.bf16.mxu0 0
        %858 = vmatpush1.bf16.msra.mxu0 0
        %859 = vmatprep.subr.bf16.mxu0 0
        %860 = vmatpush1.bf16.msra.mxu0 0
        %861 = vmatprep.subr.bf16.mxu0 0
        %862 = vmatpush1.bf16.msra.mxu0 0
        %863 = vmatprep.subr.bf16.mxu0 0
        %864 = vmatpush1.bf16.msra.mxu0 %v840
        %865 = vmatprep.subr.bf16.mxu0 0
        %866 = vmatpush1.bf16.msra.mxu0 %v839
        %867 = vmatprep.subr.bf16.mxu0 0
        %868 = vmatpush2.bf16.msra.mxu0 0
        %869 = vmatprep.subr.bf16.mxu0 0
        %870 = vmatpush2.bf16.msra.mxu0 0
        %871 = vmatprep.subr.bf16.mxu0 0
        %872 = vmatpush2.bf16.msra.mxu0 0
        %873 = vmatprep.subr.bf16.mxu0 0
        %874 = vmatpush2.bf16.msra.mxu0 0
        %875 = vmatprep.subr.bf16.mxu0 0
        %876 = vmatpush2.bf16.msra.mxu0 0
        %877 = vmatprep.subr.bf16.mxu0 0
        %878 = vmatpush2.bf16.msra.mxu0 0
        %879 = vmatprep.subr.bf16.mxu0 0
        %880 = vmatpush2.bf16.msra.mxu0 0
        %881 = vmatprep.subr.bf16.mxu0 0
        %882 = vmatpush2.bf16.msra.mxu0 0
        %883 = vmatprep.mubr.bf16.mxu0 0
        %884 = vmatmul.mubr.bf16.gmra.mxu0 %v849
        %v885 = vpop.f32.mrf.mxu0
        %v886 = vadd.f32 %v846, %v885
        %v887 = vpop.f32.mrf.mxu0
        %v888 = vpop.f32.mrf.mxu0
        %v889 = vadd.f32 %v846, %v888
        %v890 = vpop.f32.mrf.mxu0
        %891 = vdwg.mxu0
        %v892 = vld [vmem:[%s701] sm:$0x1]
        %v893 = vpack.c.bf16 %v775, %v774
        %v894 = vpack.c.bf16 %v831, %v828
        %v896 = vlaneseq
        %v897 = vshrl.u32 %v896, 7
        %v898 = vsub.s32 0, %v897
        %v899 = vrot.slane %v892, %v898
        %vm901 = vcmask 64512
        %v903 = vsel %vm901, %v893, 0
        %v906 = vsel %vm901, %v894, 0
        %908 = vmatprep.subr.bf16.mxu0 0
        %909 = vmatpush1.bf16.xpose.msra.mxu0 0
        %910 = vmatprep.subr.bf16.mxu0 0
        %911 = vmatpush1.bf16.xpose.msra.mxu0 0
        %912 = vmatprep.subr.bf16.mxu0 0
        %913 = vmatpush1.bf16.xpose.msra.mxu0 0
        %914 = vmatprep.subr.bf16.mxu0 0
        %915 = vmatpush1.bf16.xpose.msra.mxu0 0
        %916 = vmatprep.subr.bf16.mxu0 0
        %917 = vmatpush1.bf16.xpose.msra.mxu0 0
        %918 = vmatprep.subr.bf16.mxu0 0
        %919 = vmatpush1.bf16.xpose.msra.mxu0 0
        %920 = vmatprep.subr.bf16.mxu0 0
        %921 = vmatpush1.bf16.xpose.msra.mxu0 0
        %922 = vmatprep.subr.bf16.mxu0 0
        %923 = vmatpush1.bf16.xpose.msra.mxu0 %v906
        %924 = vmatprep.subr.bf16.mxu0 0
        %925 = vmatpush2.bf16.xpose.msra.mxu0 0
        %926 = vmatprep.subr.bf16.mxu0 0
        %927 = vmatpush2.bf16.xpose.msra.mxu0 0
        %928 = vmatprep.subr.bf16.mxu0 0
        %929 = vmatpush2.bf16.xpose.msra.mxu0 0
        %930 = vmatprep.subr.bf16.mxu0 0
        %931 = vmatpush2.bf16.xpose.msra.mxu0 0
        %932 = vmatprep.subr.bf16.mxu0 0
        %933 = vmatpush2.bf16.xpose.msra.mxu0 0
        %934 = vmatprep.subr.bf16.mxu0 0
        %935 = vmatpush2.bf16.xpose.msra.mxu0 0
        %936 = vmatprep.subr.bf16.mxu0 0
        %937 = vmatpush2.bf16.xpose.msra.mxu0 0
        %938 = vmatprep.subr.bf16.mxu0 0
        %939 = vmatpush2.bf16.xpose.msra.mxu0 0
        %940 = vmatprep.mubr.bf16.mxu0 0
        %941 = vmatmul.mubr.bf16.gmra.mxu0 %v903
        %v942 = vpop.f32.mrf.mxu0
        %v943 = vadd.f32 %v899, %v942
        %v944 = vpop.f32.mrf.mxu0
        %v945 = vpop.f32.mrf.mxu0
        %v946 = vadd.f32 %v899, %v945
        %v947 = vpop.f32.mrf.mxu0
        %948 = vdwg.mxu0
        %vm949 = vcmask 130048
        %v950 = vsel %vm949, %v943, -inf
        %951 = vmax.xlane.f32.xlu0 %v950
        %v952 = vpop.xlane.xlu0 %951
        %v953 = vsel %vm949, %v946, -inf
        %954 = vmax.xlane.f32.xlu0 %v953
        %v955 = vpop.xlane.xlu0 %954
        %v956 = vsub.f32 %v943, %v952
        %v957 = vsub.f32 %v946, %v955
        %v958 = vmul.f32 %v956, 1.442695
        %v959 = vpow.pop %v958
        %v960 = vmul.f32 %v957, 1.442695
        %v961 = vpow.pop %v960
        %v962 = vsel %vm949, %v959, 0.0
        %963 = vadd.xlane.f32.xlu0 %v962
        %v964 = vpop.xlane.xlu0 %963
        %v965 = vsel %vm949, %v961, 0.0
        %966 = vadd.xlane.f32.xlu0 %v965
        %v967 = vpop.xlane.xlu0 %966
        %v968 = vrcp.pop %v964
        %v969 = vrcp.pop %v967
        %v970 = vmul.f32 %v959, %v968
        %v971 = vmul.f32 %v961, %v969
        %v972 = vpack.c.bf16 %v971, %v970
        %v973 = vpack.c.bf16 %v889, %v886
        %v975 = vsel %vm949, %v972, 0
        %977 = vmatprep.subr.bf16.mxu0 0
        %978 = vmatpush1.bf16.msra.mxu0 0
        %979 = vmatprep.subr.bf16.mxu0 0
        %980 = vmatpush1.bf16.msra.mxu0 0
        %981 = vmatprep.subr.bf16.mxu0 0
        %982 = vmatpush1.bf16.msra.mxu0 0
        %983 = vmatprep.subr.bf16.mxu0 0
        %984 = vmatpush1.bf16.msra.mxu0 0
        %985 = vmatprep.subr.bf16.mxu0 0
        %986 = vmatpush1.bf16.msra.mxu0 0
        %987 = vmatprep.subr.bf16.mxu0 0
        %988 = vmatpush1.bf16.msra.mxu0 0
        %989 = vmatprep.subr.bf16.mxu0 0
        %990 = vmatpush1.bf16.msra.mxu0 0
        %991 = vmatprep.subr.bf16.mxu0 0
        %992 = vmatpush1.bf16.msra.mxu0 %v973
        %993 = vmatprep.subr.bf16.mxu0 0
        %994 = vmatpush2.bf16.msra.mxu0 0
        %995 = vmatprep.subr.bf16.mxu0 0
        %996 = vmatpush2.bf16.msra.mxu0 0
        %997 = vmatprep.subr.bf16.mxu0 0
        %998 = vmatpush2.bf16.msra.mxu0 0
        %999 = vmatprep.subr.bf16.mxu0 0
        %1000 = vmatpush2.bf16.msra.mxu0 0
        %1001 = vmatprep.subr.bf16.mxu0 0
        %1002 = vmatpush2.bf16.msra.mxu0 0
        %1003 = vmatprep.subr.bf16.mxu0 0
        %1004 = vmatpush2.bf16.msra.mxu0 0
        %1005 = vmatprep.subr.bf16.mxu0 0
        %1006 = vmatpush2.bf16.msra.mxu0 0
        %1007 = vmatprep.subr.bf16.mxu0 0
        %1008 = vmatpush2.bf16.msra.mxu0 0
        %1009 = vmatprep.mubr.bf16.mxu0 0
        %1010 = vmatmul.mubr.bf16.gmra.mxu0 %v975
        %v1011 = vpop.f32.mrf.mxu0
        %v1012 = vadd.f32 0.0, %v1011
        %v1013 = vpop.f32.mrf.mxu0
        %v1014 = vpop.f32.mrf.mxu0
        %v1015 = vadd.f32 0.0, %v1014
        %v1016 = vpop.f32.mrf.mxu0
        %1017 = vdwg.mxu0
        %v1018 = vld [vmem:[#allocation14] sm:$0xff]
        %v1019 = vpack.c.bf16 %v1015, %v1012
        %v1020 = vpack.c.bf16 %v1018, %v1018
        %1022 = vrot.lane.b32.xlu0 %v893, 120
        %v1023 = vpop.permute.xlu0 %1022
        %1025 = vrot.lane.b32.xlu0 %v894, 120
        %v1026 = vpop.permute.xlu0 %1025
        %v1028 = vsel %vm901, %v1023, 0
        %v1031 = vsel %vm901, %v1026, 0
        %1033 = vmatprep.subr.bf16.mxu0 0
        %1034 = vmatpush1.bf16.xpose.msra.mxu0 0
        %1035 = vmatprep.subr.bf16.mxu0 0
        %1036 = vmatpush1.bf16.xpose.msra.mxu0 0
        %1037 = vmatprep.subr.bf16.mxu0 0
        %1038 = vmatpush1.bf16.xpose.msra.mxu0 0
        %1039 = vmatprep.subr.bf16.mxu0 0
        %1040 = vmatpush1.bf16.xpose.msra.mxu0 0
        %1041 = vmatprep.subr.bf16.mxu0 0
        %1042 = vmatpush1.bf16.xpose.msra.mxu0 0
        %1043 = vmatprep.subr.bf16.mxu0 0
        %1044 = vmatpush1.bf16.xpose.msra.mxu0 0
        %1045 = vmatprep.subr.bf16.mxu0 0
        %1046 = vmatpush1.bf16.xpose.msra.mxu0 0
        %1047 = vmatprep.subr.bf16.mxu0 0
        %1048 = vmatpush1.bf16.xpose.msra.mxu0 %v1031
        %1049 = vmatprep.subr.bf16.mxu0 0
        %1050 = vmatpush2.bf16.xpose.msra.mxu0 0
        %1051 = vmatprep.subr.bf16.mxu0 0
        %1052 = vmatpush2.bf16.xpose.msra.mxu0 0
        %1053 = vmatprep.subr.bf16.mxu0 0
        %1054 = vmatpush2.bf16.xpose.msra.mxu0 0
        %1055 = vmatprep.subr.bf16.mxu0 0
        %1056 = vmatpush2.bf16.xpose.msra.mxu0 0
        %1057 = vmatprep.subr.bf16.mxu0 0
        %1058 = vmatpush2.bf16.xpose.msra.mxu0 0
        %1059 = vmatprep.subr.bf16.mxu0 0
        %1060 = vmatpush2.bf16.xpose.msra.mxu0 0
        %1061 = vmatprep.subr.bf16.mxu0 0
        %1062 = vmatpush2.bf16.xpose.msra.mxu0 0
        %1063 = vmatprep.subr.bf16.mxu0 0
        %1064 = vmatpush2.bf16.xpose.msra.mxu0 0
        %1065 = vmatprep.mubr.bf16.mxu0 0
        %1066 = vmatmul.mubr.bf16.gmra.mxu0 %v1028
        %v1067 = vpop.f32.mrf.mxu0
        %v1068 = vadd.f32 %v899, %v1067
        %v1069 = vpop.f32.mrf.mxu0
        %v1070 = vpop.f32.mrf.mxu0
        %v1071 = vadd.f32 %v899, %v1070
        %v1072 = vpop.f32.mrf.mxu0
        %1073 = vdwg.mxu0
        %v1074 = vsel %vm949, %v1068, -inf
        %1075 = vmax.xlane.f32.xlu0 %v1074
        %v1076 = vpop.xlane.xlu0 %1075
        %v1077 = vsel %vm949, %v1071, -inf
        %1078 = vmax.xlane.f32.xlu0 %v1077
        %v1079 = vpop.xlane.xlu0 %1078
        %v1080 = vsub.f32 %v1068, %v1076
        %v1081 = vsub.f32 %v1071, %v1079
        %v1082 = vmul.f32 %v1080, 1.442695
        %v1083 = vpow.pop %v1082
        %v1084 = vmul.f32 %v1081, 1.442695
        %v1085 = vpow.pop %v1084
        %v1086 = vsel %vm949, %v1083, 0.0
        %1087 = vadd.xlane.f32.xlu0 %v1086
        %v1088 = vpop.xlane.xlu0 %1087
        %v1089 = vsel %vm949, %v1085, 0.0
        %1090 = vadd.xlane.f32.xlu0 %v1089
        %v1091 = vpop.xlane.xlu0 %1090
        %v1092 = vrcp.pop %v1088
        %v1093 = vrcp.pop %v1091
        %v1094 = vmul.f32 %v1083, %v1092
        %v1095 = vmul.f32 %v1085, %v1093
        %v1096 = vpack.c.bf16 %v1095, %v1094
        %1098 = vrot.lane.b32.xlu0 %v973, 120
        %v1099 = vpop.permute.xlu0 %1098
        %v1102 = vsel %vm949, %v1096, 0
        %1104 = vmatprep.subr.bf16.mxu0 0
        %1105 = vmatpush1.bf16.msra.mxu0 0
        %1106 = vmatprep.subr.bf16.mxu0 0
        %1107 = vmatpush1.bf16.msra.mxu0 0
        %1108 = vmatprep.subr.bf16.mxu0 0
        %1109 = vmatpush1.bf16.msra.mxu0 0
        %1110 = vmatprep.subr.bf16.mxu0 0
        %1111 = vmatpush1.bf16.msra.mxu0 0
        %1112 = vmatprep.subr.bf16.mxu0 0
        %1113 = vmatpush1.bf16.msra.mxu0 0
        %1114 = vmatprep.subr.bf16.mxu0 0
        %1115 = vmatpush1.bf16.msra.mxu0 0
        %1116 = vmatprep.subr.bf16.mxu0 0
        %1117 = vmatpush1.bf16.msra.mxu0 0
        %1118 = vmatprep.subr.bf16.mxu0 0
        %1119 = vmatpush1.bf16.msra.mxu0 %v1099
        %1120 = vmatprep.subr.bf16.mxu0 0
        %1121 = vmatpush2.bf16.msra.mxu0 0
        %1122 = vmatprep.subr.bf16.mxu0 0
        %1123 = vmatpush2.bf16.msra.mxu0 0
        %1124 = vmatprep.subr.bf16.mxu0 0
        %1125 = vmatpush2.bf16.msra.mxu0 0
        %1126 = vmatprep.subr.bf16.mxu0 0
        %1127 = vmatpush2.bf16.msra.mxu0 0
        %1128 = vmatprep.subr.bf16.mxu0 0
        %1129 = vmatpush2.bf16.msra.mxu0 0
        %1130 = vmatprep.subr.bf16.mxu0 0
        %1131 = vmatpush2.bf16.msra.mxu0 0
        %1132 = vmatprep.subr.bf16.mxu0 0
        %1133 = vmatpush2.bf16.msra.mxu0 0
        %1134 = vmatprep.subr.bf16.mxu0 0
        %1135 = vmatpush2.bf16.msra.mxu0 0
        %1136 = vmatprep.mubr.bf16.mxu0 0
        %1137 = vmatmul.mubr.bf16.gmra.mxu0 %v1102
        %v1138 = vpop.f32.mrf.mxu0
        %v1139 = vadd.f32 0.0, %v1138
        %v1140 = vpop.f32.mrf.mxu0
        %v1141 = vpop.f32.mrf.mxu0
        %v1142 = vadd.f32 0.0, %v1141
        %v1143 = vpop.f32.mrf.mxu0
        %1144 = vdwg.mxu0
        %v1145 = vld [vmem:[#allocation14 + $0x8] sm:$0xff]
        %v1146 = vpack.c.bf16 %v1142, %v1139
        %v1147 = vpack.c.bf16 %v1145, %v1145
        %v1149 = vsel %vm901, %v1146, 0
        %vm1151 = vcmask 1043456
        %v1153 = vsel %vm1151, %v1147, 0
        %1155 = vmatprep.subr.bf16.mxu0 0
        %1156 = vmatpush1.bf16.msra.mxu0 0
        %1157 = vmatprep.subr.bf16.mxu0 0
        %1158 = vmatpush1.bf16.msra.mxu0 0
        %1159 = vmatprep.subr.bf16.mxu0 0
        %1160 = vmatpush1.bf16.msra.mxu0 0
        %1161 = vmatprep.subr.bf16.mxu0 0
        %1162 = vmatpush1.bf16.msra.mxu0 0
        %1163 = vmatprep.subr.bf16.mxu0 0
        %1164 = vmatpush1.bf16.msra.mxu0 0
        %1165 = vmatprep.subr.bf16.mxu0 0
        %1166 = vmatpush1.bf16.msra.mxu0 0
        %1167 = vmatprep.subr.bf16.mxu0 0
        %1168 = vmatpush1.bf16.msra.mxu0 0
        %1169 = vmatprep.subr.bf16.mxu0 0
        %1170 = vmatpush1.bf16.msra.mxu0 %v1153
        %1171 = vmatprep.subr.bf16.mxu0 0
        %1172 = vmatpush2.bf16.msra.mxu0 0
        %1173 = vmatprep.subr.bf16.mxu0 0
        %1174 = vmatpush2.bf16.msra.mxu0 0
        %1175 = vmatprep.subr.bf16.mxu0 0
        %1176 = vmatpush2.bf16.msra.mxu0 0
        %1177 = vmatprep.subr.bf16.mxu0 0
        %1178 = vmatpush2.bf16.msra.mxu0 0
        %1179 = vmatprep.subr.bf16.mxu0 0
        %1180 = vmatpush2.bf16.msra.mxu0 0
        %1181 = vmatprep.subr.bf16.mxu0 0
        %1182 = vmatpush2.bf16.msra.mxu0 0
        %1183 = vmatprep.subr.bf16.mxu0 0
        %1184 = vmatpush2.bf16.msra.mxu0 0
        %1185 = vmatprep.subr.bf16.mxu0 0
        %1186 = vmatpush2.bf16.msra.mxu0 0
        %1187 = vmatprep.mubr.bf16.mxu0 0
        %1188 = vmatmul.mubr.bf16.gmra.mxu0 %v1149
        %v1189 = vpop.f32.mrf.mxu0
        %v1190 = vadd.f32 0.0, %v1189
        %v1191 = vpop.f32.mrf.mxu0
        %v1192 = vpop.f32.mrf.mxu0
        %v1193 = vadd.f32 0.0, %v1192
        %v1194 = vpop.f32.mrf.mxu0
        %1195 = vdwg.mxu0
        %v1197 = vsel %vm901, %v1019, 0
        %v1200 = vsel %vm1151, %v1020, 0
        %1202 = vmatprep.subr.bf16.mxu0 0
        %1203 = vmatpush1.bf16.msra.mxu0 0
        %1204 = vmatprep.subr.bf16.mxu0 0
        %1205 = vmatpush1.bf16.msra.mxu0 0
        %1206 = vmatprep.subr.bf16.mxu0 0
        %1207 = vmatpush1.bf16.msra.mxu0 0
        %1208 = vmatprep.subr.bf16.mxu0 0
        %1209 = vmatpush1.bf16.msra.mxu0 0
        %1210 = vmatprep.subr.bf16.mxu0 0
        %1211 = vmatpush1.bf16.msra.mxu0 0
        %1212 = vmatprep.subr.bf16.mxu0 0
        %1213 = vmatpush1.bf16.msra.mxu0 0
        %1214 = vmatprep.subr.bf16.mxu0 0
        %1215 = vmatpush1.bf16.msra.mxu0 0
        %1216 = vmatprep.subr.bf16.mxu0 0
        %1217 = vmatpush1.bf16.msra.mxu0 %v1200
        %1218 = vmatprep.subr.bf16.mxu0 0
        %1219 = vmatpush2.bf16.msra.mxu0 0
        %1220 = vmatprep.subr.bf16.mxu0 0
        %1221 = vmatpush2.bf16.msra.mxu0 0
        %1222 = vmatprep.subr.bf16.mxu0 0
        %1223 = vmatpush2.bf16.msra.mxu0 0
        %1224 = vmatprep.subr.bf16.mxu0 0
        %1225 = vmatpush2.bf16.msra.mxu0 0
        %1226 = vmatprep.subr.bf16.mxu0 0
        %1227 = vmatpush2.bf16.msra.mxu0 0
        %1228 = vmatprep.subr.bf16.mxu0 0
        %1229 = vmatpush2.bf16.msra.mxu0 0
        %1230 = vmatprep.subr.bf16.mxu0 0
        %1231 = vmatpush2.bf16.msra.mxu0 0
        %1232 = vmatprep.subr.bf16.mxu0 0
        %1233 = vmatpush2.bf16.msra.mxu0 0
        %1234 = vmatprep.mubr.bf16.mxu0 0
        %1235 = vmatmul.mubr.bf16.gmra.mxu0 %v1197
        %v1236 = vpop.f32.mrf.mxu0
        %v1237 = vadd.f32 %v1190, %v1236
        %v1238 = vpop.f32.mrf.mxu0
        %v1239 = vpop.f32.mrf.mxu0
        %v1240 = vadd.f32 %v1193, %v1239
        %v1241 = vpop.f32.mrf.mxu0
        %1242 = vdwg.mxu0
        %1243 = vrot.lane.b32.xlu0 %v893, 112
        %v1244 = vpop.permute.xlu0 %1243
        %1245 = vrot.lane.b32.xlu0 %v894, 112
        %v1246 = vpop.permute.xlu0 %1245
        %v1248 = vsel %vm901, %v1244, 0
        %v1251 = vsel %vm901, %v1246, 0
        %1253 = vmatprep.subr.bf16.mxu0 0
        %1254 = vmatpush1.bf16.xpose.msra.mxu0 0
        %1255 = vmatprep.subr.bf16.mxu0 0
        %1256 = vmatpush1.bf16.xpose.msra.mxu0 0
        %1257 = vmatprep.subr.bf16.mxu0 0
        %1258 = vmatpush1.bf16.xpose.msra.mxu0 0
        %1259 = vmatprep.subr.bf16.mxu0 0
        %1260 = vmatpush1.bf16.xpose.msra.mxu0 0
        %1261 = vmatprep.subr.bf16.mxu0 0
        %1262 = vmatpush1.bf16.xpose.msra.mxu0 0
        %1263 = vmatprep.subr.bf16.mxu0 0
        %1264 = vmatpush1.bf16.xpose.msra.mxu0 0
        %1265 = vmatprep.subr.bf16.mxu0 0
        %1266 = vmatpush1.bf16.xpose.msra.mxu0 0
        %1267 = vmatprep.subr.bf16.mxu0 0
        %1268 = vmatpush1.bf16.xpose.msra.mxu0 %v1251
        %1269 = vmatprep.subr.bf16.mxu0 0
        %1270 = vmatpush2.bf16.xpose.msra.mxu0 0
        %1271 = vmatprep.subr.bf16.mxu0 0
        %1272 = vmatpush2.bf16.xpose.msra.mxu0 0
        %1273 = vmatprep.subr.bf16.mxu0 0
        %1274 = vmatpush2.bf16.xpose.msra.mxu0 0
        %1275 = vmatprep.subr.bf16.mxu0 0
        %1276 = vmatpush2.bf16.xpose.msra.mxu0 0
        %1277 = vmatprep.subr.bf16.mxu0 0
        %1278 = vmatpush2.bf16.xpose.msra.mxu0 0
        %1279 = vmatprep.subr.bf16.mxu0 0
        %1280 = vmatpush2.bf16.xpose.msra.mxu0 0
        %1281 = vmatprep.subr.bf16.mxu0 0
        %1282 = vmatpush2.bf16.xpose.msra.mxu0 0
        %1283 = vmatprep.subr.bf16.mxu0 0
        %1284 = vmatpush2.bf16.xpose.msra.mxu0 0
        %1285 = vmatprep.mubr.bf16.mxu0 0
        %1286 = vmatmul.mubr.bf16.gmra.mxu0 %v1248
        %v1287 = vpop.f32.mrf.mxu0
        %v1288 = vadd.f32 %v899, %v1287
        %v1289 = vpop.f32.mrf.mxu0
        %v1290 = vpop.f32.mrf.mxu0
        %v1291 = vadd.f32 %v899, %v1290
        %v1292 = vpop.f32.mrf.mxu0
        %1293 = vdwg.mxu0
        %v1294 = vsel %vm949, %v1288, -inf
        %1295 = vmax.xlane.f32.xlu0 %v1294
        %v1296 = vpop.xlane.xlu0 %1295
        %v1297 = vsel %vm949, %v1291, -inf
        %1298 = vmax.xlane.f32.xlu0 %v1297
        %v1299 = vpop.xlane.xlu0 %1298
        %v1300 = vsub.f32 %v1288, %v1296
        %v1301 = vsub.f32 %v1291, %v1299
        %v1302 = vmul.f32 %v1300, 1.442695
        %v1303 = vpow.pop %v1302
        %v1304 = vmul.f32 %v1301, 1.442695
        %v1305 = vpow.pop %v1304
        %v1306 = vsel %vm949, %v1303, 0.0
        %1307 = vadd.xlane.f32.xlu0 %v1306
        %v1308 = vpop.xlane.xlu0 %1307
        %v1309 = vsel %vm949, %v1305, 0.0
        %1310 = vadd.xlane.f32.xlu0 %v1309
        %v1311 = vpop.xlane.xlu0 %1310
        %v1312 = vrcp.pop %v1308
        %v1313 = vrcp.pop %v1311
        %v1314 = vmul.f32 %v1303, %v1312
        %v1315 = vmul.f32 %v1305, %v1313
        %v1316 = vpack.c.bf16 %v1315, %v1314
        %1317 = vrot.lane.b32.xlu0 %v973, 112
        %v1318 = vpop.permute.xlu0 %1317
        %v1321 = vsel %vm949, %v1316, 0
        %1323 = vmatprep.subr.bf16.mxu0 0
        %1324 = vmatpush1.bf16.msra.mxu0 0
        %1325 = vmatprep.subr.bf16.mxu0 0
        %1326 = vmatpush1.bf16.msra.mxu0 0
        %1327 = vmatprep.subr.bf16.mxu0 0
        %1328 = vmatpush1.bf16.msra.mxu0 0
        %1329 = vmatprep.subr.bf16.mxu0 0
        %1330 = vmatpush1.bf16.msra.mxu0 0
        %1331 = vmatprep.subr.bf16.mxu0 0
        %1332 = vmatpush1.bf16.msra.mxu0 0
        %1333 = vmatprep.subr.bf16.mxu0 0
        %1334 = vmatpush1.bf16.msra.mxu0 0
        %1335 = vmatprep.subr.bf16.mxu0 0
        %1336 = vmatpush1.bf16.msra.mxu0 0
        %1337 = vmatprep.subr.bf16.mxu0 0
        %1338 = vmatpush1.bf16.msra.mxu0 %v1318
        %1339 = vmatprep.subr.bf16.mxu0 0
        %1340 = vmatpush2.bf16.msra.mxu0 0
        %1341 = vmatprep.subr.bf16.mxu0 0
        %1342 = vmatpush2.bf16.msra.mxu0 0
        %1343 = vmatprep.subr.bf16.mxu0 0
        %1344 = vmatpush2.bf16.msra.mxu0 0
        %1345 = vmatprep.subr.bf16.mxu0 0
        %1346 = vmatpush2.bf16.msra.mxu0 0
        %1347 = vmatprep.subr.bf16.mxu0 0
        %1348 = vmatpush2.bf16.msra.mxu0 0
        %1349 = vmatprep.subr.bf16.mxu0 0
        %1350 = vmatpush2.bf16.msra.mxu0 0
        %1351 = vmatprep.subr.bf16.mxu0 0
        %1352 = vmatpush2.bf16.msra.mxu0 0
        %1353 = vmatprep.subr.bf16.mxu0 0
        %1354 = vmatpush2.bf16.msra.mxu0 0
        %1355 = vmatprep.mubr.bf16.mxu0 0
        %1356 = vmatmul.mubr.bf16.gmra.mxu0 %v1321
        %v1357 = vpop.f32.mrf.mxu0
        %v1358 = vadd.f32 0.0, %v1357
        %v1359 = vpop.f32.mrf.mxu0
        %v1360 = vpop.f32.mrf.mxu0
        %v1361 = vadd.f32 0.0, %v1360
        %v1362 = vpop.f32.mrf.mxu0
        %1363 = vdwg.mxu0
        %v1364 = vld [vmem:[#allocation14 + $0x10] sm:$0xff]
        %v1365 = vpack.c.bf16 %v1361, %v1358
        %v1366 = vpack.c.bf16 %v1364, %v1364
        %v1368 = vsel %vm901, %v1365, 0
        %v1371 = vsel %vm1151, %v1366, 0
        %1373 = vmatprep.subr.bf16.mxu0 0
        %1374 = vmatpush1.bf16.msra.mxu0 0
        %1375 = vmatprep.subr.bf16.mxu0 0
        %1376 = vmatpush1.bf16.msra.mxu0 0
        %1377 = vmatprep.subr.bf16.mxu0 0
        %1378 = vmatpush1.bf16.msra.mxu0 0
        %1379 = vmatprep.subr.bf16.mxu0 0
        %1380 = vmatpush1.bf16.msra.mxu0 0
        %1381 = vmatprep.subr.bf16.mxu0 0
        %1382 = vmatpush1.bf16.msra.mxu0 0
        %1383 = vmatprep.subr.bf16.mxu0 0
        %1384 = vmatpush1.bf16.msra.mxu0 0
        %1385 = vmatprep.subr.bf16.mxu0 0
        %1386 = vmatpush1.bf16.msra.mxu0 0
        %1387 = vmatprep.subr.bf16.mxu0 0
        %1388 = vmatpush1.bf16.msra.mxu0 %v1371
        %1389 = vmatprep.subr.bf16.mxu0 0
        %1390 = vmatpush2.bf16.msra.mxu0 0
        %1391 = vmatprep.subr.bf16.mxu0 0
        %1392 = vmatpush2.bf16.msra.mxu0 0
        %1393 = vmatprep.subr.bf16.mxu0 0
        %1394 = vmatpush2.bf16.msra.mxu0 0
        %1395 = vmatprep.subr.bf16.mxu0 0
        %1396 = vmatpush2.bf16.msra.mxu0 0
        %1397 = vmatprep.subr.bf16.mxu0 0
        %1398 = vmatpush2.bf16.msra.mxu0 0
        %1399 = vmatprep.subr.bf16.mxu0 0
        %1400 = vmatpush2.bf16.msra.mxu0 0
        %1401 = vmatprep.subr.bf16.mxu0 0
        %1402 = vmatpush2.bf16.msra.mxu0 0
        %1403 = vmatprep.subr.bf16.mxu0 0
        %1404 = vmatpush2.bf16.msra.mxu0 0
        %1405 = vmatprep.mubr.bf16.mxu0 0
        %1406 = vmatmul.mubr.bf16.gmra.mxu0 %v1368
        %v1407 = vpop.f32.mrf.mxu0
        %v1408 = vadd.f32 0.0, %v1407
        %v1409 = vpop.f32.mrf.mxu0
        %v1410 = vpop.f32.mrf.mxu0
        %v1411 = vadd.f32 0.0, %v1410
        %v1412 = vpop.f32.mrf.mxu0
        %1413 = vdwg.mxu0
        %v1414 = vadd.f32 %v1237, %v1408
        %v1415 = vadd.f32 %v1240, %v1411
        %1416 = vrot.lane.b32.xlu0 %v893, 104
        %v1417 = vpop.permute.xlu0 %1416
        %1418 = vrot.lane.b32.xlu0 %v894, 104
        %v1419 = vpop.permute.xlu0 %1418
        %v1421 = vsel %vm901, %v1417, 0
        %v1424 = vsel %vm901, %v1419, 0
        %1426 = vmatprep.subr.bf16.mxu0 0
        %1427 = vmatpush1.bf16.xpose.msra.mxu0 0
        %1428 = vmatprep.subr.bf16.mxu0 0
        %1429 = vmatpush1.bf16.xpose.msra.mxu0 0
        %1430 = vmatprep.subr.bf16.mxu0 0
        %1431 = vmatpush1.bf16.xpose.msra.mxu0 0
        %1432 = vmatprep.subr.bf16.mxu0 0
        %1433 = vmatpush1.bf16.xpose.msra.mxu0 0
        %1434 = vmatprep.subr.bf16.mxu0 0
        %1435 = vmatpush1.bf16.xpose.msra.mxu0 0
        %1436 = vmatprep.subr.bf16.mxu0 0
        %1437 = vmatpush1.bf16.xpose.msra.mxu0 0
        %1438 = vmatprep.subr.bf16.mxu0 0
        %1439 = vmatpush1.bf16.xpose.msra.mxu0 0
        %1440 = vmatprep.subr.bf16.mxu0 0
        %1441 = vmatpush1.bf16.xpose.msra.mxu0 %v1424
        %1442 = vmatprep.subr.bf16.mxu0 0
        %1443 = vmatpush2.bf16.xpose.msra.mxu0 0
        %1444 = vmatprep.subr.bf16.mxu0 0
        %1445 = vmatpush2.bf16.xpose.msra.mxu0 0
        %1446 = vmatprep.subr.bf16.mxu0 0
        %1447 = vmatpush2.bf16.xpose.msra.mxu0 0
        %1448 = vmatprep.subr.bf16.mxu0 0
        %1449 = vmatpush2.bf16.xpose.msra.mxu0 0
        %1450 = vmatprep.subr.bf16.mxu0 0
        %1451 = vmatpush2.bf16.xpose.msra.mxu0 0
        %1452 = vmatprep.subr.bf16.mxu0 0
        %1453 = vmatpush2.bf16.xpose.msra.mxu0 0
        %1454 = vmatprep.subr.bf16.mxu0 0
        %1455 = vmatpush2.bf16.xpose.msra.mxu0 0
        %1456 = vmatprep.subr.bf16.mxu0 0
        %1457 = vmatpush2.bf16.xpose.msra.mxu0 0
        %1458 = vmatprep.mubr.bf16.mxu0 0
        %1459 = vmatmul.mubr.bf16.gmra.mxu0 %v1421
        %v1460 = vpop.f32.mrf.mxu0
        %v1461 = vadd.f32 %v899, %v1460
        %v1462 = vpop.f32.mrf.mxu0
        %v1463 = vpop.f32.mrf.mxu0
        %v1464 = vadd.f32 %v899, %v1463
        %v1465 = vpop.f32.mrf.mxu0
        %1466 = vdwg.mxu0
        %v1467 = vsel %vm949, %v1461, -inf
        %1468 = vmax.xlane.f32.xlu0 %v1467
        %v1469 = vpop.xlane.xlu0 %1468
        %v1470 = vsel %vm949, %v1464, -inf
        %1471 = vmax.xlane.f32.xlu0 %v1470
        %v1472 = vpop.xlane.xlu0 %1471
        %v1473 = vsub.f32 %v1461, %v1469
        %v1474 = vsub.f32 %v1464, %v1472
        %v1475 = vmul.f32 %v1473, 1.442695
        %v1476 = vpow.pop %v1475
        %v1477 = vmul.f32 %v1474, 1.442695
        %v1478 = vpow.pop %v1477
        %v1479 = vsel %vm949, %v1476, 0.0
        %1480 = vadd.xlane.f32.xlu0 %v1479
        %v1481 = vpop.xlane.xlu0 %1480
        %v1482 = vsel %vm949, %v1478, 0.0
        %1483 = vadd.xlane.f32.xlu0 %v1482
        %v1484 = vpop.xlane.xlu0 %1483
        %v1485 = vrcp.pop %v1481
        %v1486 = vrcp.pop %v1484
        %v1487 = vmul.f32 %v1476, %v1485
        %v1488 = vmul.f32 %v1478, %v1486
        %v1489 = vpack.c.bf16 %v1488, %v1487
        %1490 = vrot.lane.b32.xlu0 %v973, 104
        %v1491 = vpop.permute.xlu0 %1490
        %v1494 = vsel %vm949, %v1489, 0
        %1496 = vmatprep.subr.bf16.mxu0 0
        %1497 = vmatpush1.bf16.msra.mxu0 0
        %1498 = vmatprep.subr.bf16.mxu0 0
        %1499 = vmatpush1.bf16.msra.mxu0 0
        %1500 = vmatprep.subr.bf16.mxu0 0
        %1501 = vmatpush1.bf16.msra.mxu0 0
        %1502 = vmatprep.subr.bf16.mxu0 0
        %1503 = vmatpush1.bf16.msra.mxu0 0
        %1504 = vmatprep.subr.bf16.mxu0 0
        %1505 = vmatpush1.bf16.msra.mxu0 0
        %1506 = vmatprep.subr.bf16.mxu0 0
        %1507 = vmatpush1.bf16.msra.mxu0 0
        %1508 = vmatprep.subr.bf16.mxu0 0
        %1509 = vmatpush1.bf16.msra.mxu0 0
        %1510 = vmatprep.subr.bf16.mxu0 0
        %1511 = vmatpush1.bf16.msra.mxu0 %v1491
        %1512 = vmatprep.subr.bf16.mxu0 0
        %1513 = vmatpush2.bf16.msra.mxu0 0
        %1514 = vmatprep.subr.bf16.mxu0 0
        %1515 = vmatpush2.bf16.msra.mxu0 0
        %1516 = vmatprep.subr.bf16.mxu0 0
        %1517 = vmatpush2.bf16.msra.mxu0 0
        %1518 = vmatprep.subr.bf16.mxu0 0
        %1519 = vmatpush2.bf16.msra.mxu0 0
        %1520 = vmatprep.subr.bf16.mxu0 0
        %1521 = vmatpush2.bf16.msra.mxu0 0
        %1522 = vmatprep.subr.bf16.mxu0 0
        %1523 = vmatpush2.bf16.msra.mxu0 0
        %1524 = vmatprep.subr.bf16.mxu0 0
        %1525 = vmatpush2.bf16.msra.mxu0 0
        %1526 = vmatprep.subr.bf16.mxu0 0
        %1527 = vmatpush2.bf16.msra.mxu0 0
        %1528 = vmatprep.mubr.bf16.mxu0 0
        %1529 = vmatmul.mubr.bf16.gmra.mxu0 %v1494
        %v1530 = vpop.f32.mrf.mxu0
        %v1531 = vadd.f32 0.0, %v1530
        %v1532 = vpop.f32.mrf.mxu0
        %v1533 = vpop.f32.mrf.mxu0
        %v1534 = vadd.f32 0.0, %v1533
        %v1535 = vpop.f32.mrf.mxu0
        %1536 = vdwg.mxu0
        %v1537 = vld [vmem:[#allocation14 + $0x18] sm:$0xff]
        %v1538 = vpack.c.bf16 %v1534, %v1531
        %v1539 = vpack.c.bf16 %v1537, %v1537
        %v1541 = vsel %vm901, %v1538, 0
        %v1544 = vsel %vm1151, %v1539, 0
        %1546 = vmatprep.subr.bf16.mxu0 0
        %1547 = vmatpush1.bf16.msra.mxu0 0
        %1548 = vmatprep.subr.bf16.mxu0 0
        %1549 = vmatpush1.bf16.msra.mxu0 0
        %1550 = vmatprep.subr.bf16.mxu0 0
        %1551 = vmatpush1.bf16.msra.mxu0 0
        %1552 = vmatprep.subr.bf16.mxu0 0
        %1553 = vmatpush1.bf16.msra.mxu0 0
        %1554 = vmatprep.subr.bf16.mxu0 0
        %1555 = vmatpush1.bf16.msra.mxu0 0
        %1556 = vmatprep.subr.bf16.mxu0 0
        %1557 = vmatpush1.bf16.msra.mxu0 0
        %1558 = vmatprep.subr.bf16.mxu0 0
        %1559 = vmatpush1.bf16.msra.mxu0 0
        %1560 = vmatprep.subr.bf16.mxu0 0
        %1561 = vmatpush1.bf16.msra.mxu0 %v1544
        %1562 = vmatprep.subr.bf16.mxu0 0
        %1563 = vmatpush2.bf16.msra.mxu0 0
        %1564 = vmatprep.subr.bf16.mxu0 0
        %1565 = vmatpush2.bf16.msra.mxu0 0
        %1566 = vmatprep.subr.bf16.mxu0 0
        %1567 = vmatpush2.bf16.msra.mxu0 0
        %1568 = vmatprep.subr.bf16.mxu0 0
        %1569 = vmatpush2.bf16.msra.mxu0 0
        %1570 = vmatprep.subr.bf16.mxu0 0
        %1571 = vmatpush2.bf16.msra.mxu0 0
        %1572 = vmatprep.subr.bf16.mxu0 0
        %1573 = vmatpush2.bf16.msra.mxu0 0
        %1574 = vmatprep.subr.bf16.mxu0 0
        %1575 = vmatpush2.bf16.msra.mxu0 0
        %1576 = vmatprep.subr.bf16.mxu0 0
        %1577 = vmatpush2.bf16.msra.mxu0 0
        %1578 = vmatprep.mubr.bf16.mxu0 0
        %1579 = vmatmul.mubr.bf16.gmra.mxu0 %v1541
        %v1580 = vpop.f32.mrf.mxu0
        %v1581 = vadd.f32 0.0, %v1580
        %v1582 = vpop.f32.mrf.mxu0
        %v1583 = vpop.f32.mrf.mxu0
        %v1584 = vadd.f32 0.0, %v1583
        %v1585 = vpop.f32.mrf.mxu0
        %1586 = vdwg.mxu0
        %v1587 = vadd.f32 %v1414, %v1581
        %v1588 = vadd.f32 %v1415, %v1584
        %v1589 = vld [vmem:[%s12] sm:$0x1]
        %v1591 = vlaneseq
        %v1592 = vshrl.u32 %v1591, 7
        %v1593 = vsub.s32 0, %v1592
        %v1594 = vrot.slane %v1589, %v1593
        %v1596 = vadd.f32 %v1587, %v1594
        %v1597 = vadd.f32 %v1588, %v1594
        %v1598 = vadd.f32 %v703, %v1596
        %v1599 = vadd.f32 %v704, %v1597
        %v1600 = vld [vmem:[%s13] sm:$0x1]
        %v1601 = vld [vmem:[%s14] sm:$0x1]
        %v1602 = vsel %vm729, %v1598, 0.0
        %1603 = vadd.xlane.f32.xlu0 %v1602
        %v1604 = vpop.xlane.xlu0 %1603
        %v1605 = vsel %vm729, %v1599, 0.0
        %1606 = vadd.xlane.f32.xlu0 %v1605
        %v1607 = vpop.xlane.xlu0 %1606
        %v1608 = vrcp.pop 32.0
        %v1609 = vmul.f32 %v1604, %v1608
        %v1610 = vmul.f32 %v1607, %v1608
        %v1611 = vsub.f32 %v1598, %v1609
        %v1612 = vsub.f32 %v1599, %v1610
        %v1613 = vmul.f32 %v1611, %v1611
        %v1614 = vmul.f32 %v1612, %v1612
        %v1615 = vsel %vm729, %v1613, 0.0
        %1616 = vadd.xlane.f32.xlu0 %v1615
        %v1617 = vpop.xlane.xlu0 %1616
        %v1618 = vsel %vm729, %v1614, 0.0
        %1619 = vadd.xlane.f32.xlu0 %v1618
        %v1620 = vpop.xlane.xlu0 %1619
        %v1621 = vmul.f32 %v1617, %v1608
        %v1622 = vmul.f32 %v1620, %v1608
        %v1623 = vadd.f32 %v1621, 1e-05
        %v1624 = vadd.f32 %v1622, 1e-05
        %v1625 = vrsqrt.pop %v1623
        %v1626 = vrsqrt.pop %v1624
        %v1627 = vmul.f32 %v1611, %v1625
        %v1628 = vmul.f32 %v1612, %v1626
        %v1630 = vlaneseq
        %v1631 = vshrl.u32 %v1630, 7
        %v1632 = vsub.s32 0, %v1631
        %v1633 = vrot.slane %v1600, %v1632
        %v1635 = vmul.f32 %v1627, %v1633
        %v1636 = vmul.f32 %v1628, %v1633
        %v1638 = vlaneseq
        %v1639 = vshrl.u32 %v1638, 7
        %v1640 = vsub.s32 0, %v1639
        %v1641 = vrot.slane %v1601, %v1640
        %v1643 = vadd.f32 %v1635, %v1641
        %v1644 = vadd.f32 %v1636, %v1641
        %1645 = vst.msk [vmem:[%s698] sm:$0xff] %vm729, %v1643
        %1646 = vst.msk [vmem:[%s698 + $0x8] sm:$0xff] %vm729, %v1644
        %s1647 = sand.u32 %s388, 1
        %s1648 = scalar_lea.sflag [#allocation4], %s1647
        %s1649 = sand.u32 %s388, 1
        %s1650 = smul.addr %s1649, 16
        %s1651 = scalar_lea.vmem [#allocation16], %s1650
        // Predicated region
        $region113: #{tpu_custom_call.1} parent=79 // pred_check
          %p1652 = pneg %p398
        $region114: #{tpu_custom_call.1} parent=79 // pred_check_branch
          %1654 = sbr.rel (%p1652) target = $region116
        $region115: #{tpu_custom_call.1} parent=79 // pred_region
          %s1656 = ssub.s32 256, 256
          %1657 = vsyncadd %s1648, %s1656
          %s1658 = smul.addr %s40, 2
          %s1659 = smul.addr %s1658, 128
          %s1660 = scalar_lea.hbm %s15, %s1659
          %s1661 = sshll.u32 %s1651, 4
          %s1662 = int_to_ptr.vmem [resolvable:$true] %s1661
          %1667 = dma.vmem_to_hbm [thread:$0]  %s1662, 256, %s1660, %s1648, 128, 128, 8
        $region116: #{tpu_custom_call.1} parent=79 // pred_fallthru
          _
      $region80: #{tpu_custom_call.1} parent=5 // pred_fallthru
        _
      %p1668 = scmp.le.s32.totalorder 2, %s35
      // Predicated region
      $region117: #{tpu_custom_call.1} parent=5 // pred_check
        %p1669 = pneg %p1668
      $region118: #{tpu_custom_call.1} parent=5 // pred_check_branch
        %1671 = sbr.rel (%p1669) target = $region120
      $region119: #{tpu_custom_call.1} parent=5 // pred_region
        %s1672 = ssub.s32 %s35, 2
        // Predicated region
        $region121: #{tpu_custom_call.1} parent=119 // pred_check
          %p1673 = pneg %p404
        $region122: #{tpu_custom_call.1} parent=119 // pred_check_branch
          %1675 = sbr.rel (%p1673) target = $region124
        $region123: #{tpu_custom_call.1} parent=119 // pred_region
          %s1676 = sand.u32 %s389, 1
          %s1677 = scalar_lea.sflag [#allocation4], %s1676
          %s1678 = sand.u32 %s389, 1
          %s1679 = smul.addr %s1678, 16
          %s1680 = scalar_lea.vmem [#allocation16], %s1679
          %1681 = dma.done %s1677, 256
        $region124: #{tpu_custom_call.1} parent=119 // pred_fallthru
          _
      $region120: #{tpu_custom_call.1} parent=5 // pred_fallthru
        _
    $region6: #{tpu_custom_call.1} parent=1 // loop_footer
      %s39 = sadd.s32 1, %s35
    $region7: #{tpu_custom_call.1} parent=1 // loop_footer_branch
      %34 = sbr.rel target = $region3
    $region8: #{tpu_custom_call.1} parent=1 // loop_exit
      _
    %1682 = vsyncpa [#allocation3], 1
    %s1683 = scalar_lea.sflag [#allocation3], 1
    %1684 = vsyncpa %s1683, 1
    %1685 = vsyncpa [#allocation6], 1
    %s1686 = scalar_lea.sflag [#allocation6], 1
    %1687 = vsyncpa %s1686, 1
    %1688 = vsyncpa [#allocation9], 1
    %s1689 = scalar_lea.sflag [#allocation9], 1
    %1690 = vsyncpa %s1689, 1
    %1691 = vsyncpa [#allocation12], 1
    %1692 = vsyncpa [#allocation15], 1
    %1693 = vsyncpa [#allocation4], 1
    %s1694 = scalar_lea.sflag [#allocation4], 1
    %1695 = vsyncpa %s1694, 1

</llo_original>
